<compile_context>
chip_gen: v7x
topology: tpu7x:2x2x1
jax: 0.10.0
libtpu: 0.0.40
codegen_flags: <defaults>
</compile_context>

<pallas_src>
import functools

import jax
import jax.numpy as jnp
from jax import lax
from jax.experimental import pallas as pl
from jax.experimental.pallas import tpu as pltpu


# ----------------------------- kernel ---------------------------------------

def mamba_block_kernel(
    x_ref,                       # (Bt, L, Dp)   input dtype (channel lanes zero-padded)
    gamma_ref, beta_ref,         # (1, Dp) f32   LayerNorm
    convw_ref, convb_ref,        # (3*Dp, Dp+128) bf16 / (1, Dp+128) f32  conv ++ folded gate col
    wssm_ref, bssm_ref,          # (Dp, Dp) bf16 / (1, Dp) f32            SSM out projection
    wf_ref, bf_ref,              # (Dp, 2*Dp) bf16 / (1, 2*Dp) f32        fused MLP fc (gate|value)
    wmo_ref, bmo_ref,            # (Dp, Dp) bf16 / (1, Dp) f32            MLP out projection
    o_ref,                       # (Bt, L, Dp)
    *, d_true,
):
    Bt, L, Dp = x_ref.shape
    M = Bt * L
    f32, bf16 = jnp.float32, jnp.bfloat16

    x = x_ref[...].astype(f32).reshape(M, Dp)          # padded lanes are exact zeros

    # ---- LayerNorm over the true D channels (two-pass variance, padded lanes masked) ----
    inv_d = jnp.float32(1.0 / d_true)
    mu = jnp.sum(x, axis=-1, keepdims=True) * inv_d
    xc = x - mu
    if d_true != Dp:                                    # zero the padded lanes of (x - mu)
        lane_ok = lax.broadcasted_iota(jnp.int32, (1, Dp), 1) < d_true
        xc = jnp.where(lane_ok, xc, 0.0)
    var = jnp.sum(xc * xc, axis=-1, keepdims=True) * inv_d
    y = xc * lax.rsqrt(var + 1e-5) * gamma_ref[...] + beta_ref[...]

    # ---- Conv1d(k=3, p=1) + folded SSM gate: one (M, 3Dp) @ (3Dp, Dp+128) MXU matmul ----
    # Sublane shifts are done in f32 (lane-aligned, proven layout path); the wide
    # (M, 3Dp) operand only ever exists in bf16 (the MXU consumes bf16 anyway).
    y3 = y.reshape(Bt, L, Dp)
    zrow = jnp.zeros((Bt, 1, Dp), f32)
    y_prev = jnp.concatenate([zrow, y3[:, : L - 1, :]], axis=1)   # y[t-1], zero at t=0
    y_next = jnp.concatenate([y3[:, 1:, :], zrow], axis=1)        # y[t+1], zero at t=L-1
    y_cat = jnp.concatenate(
        [y_prev.astype(bf16), y3.astype(bf16), y_next.astype(bf16)], axis=-1
    ).reshape(M, 3 * Dp)                                          # (M, 3Dp) bf16
    z = jnp.dot(y_cat, convw_ref[...], preferred_element_type=f32) + convb_ref[...]
    conv = z[:, :Dp]                                              # (M, Dp)  conv output
    g = jax.nn.sigmoid(z[:, Dp:Dp + 1])                           # (M, 1)   selective gate

    # ---- SSM recurrence  h_t = (1-g_t) h_{t-1} + g_t x_t ,  h_{-1}=0 :  doubling scan ----
    # Affine-map composition (A, B); A stays (M, 1) since the gate is per-(batch, t).
    # Shifted operands via XLU roll + iota mask (identity fill 1 for A, 0 for B).
    pos = lax.broadcasted_iota(jnp.int32, (Bt, L, 1), 1).reshape(M, 1)   # t within sequence
    a = 1.0 - g                                                   # (M, 1)
    b = g * conv                                                  # (M, Dp)
    s = 1
    while s < L:                                                  # ceil(log2 L) VPU steps
        keep = pos >= s                                           # masks batch wrap-around too
        a_sh = jnp.where(keep, pltpu.roll(a, s, axis=0), 1.0)
        b_sh = jnp.where(keep, pltpu.roll(b, s, axis=0), 0.0)
        b = a * b_sh + b
        a = a * a_sh
        s *= 2
    h = b                                                         # (M, Dp) = h_t

    # ---- SSM output projection ----
    ssm = jnp.dot(h.astype(bf16), wssm_ref[...], preferred_element_type=f32) + bssm_ref[...]

    # ---- Gated MLP: fused fc (gate|value) -> sigmoid(gate) * value -> out ----
    zf = jnp.dot(ssm.astype(bf16), wf_ref[...], preferred_element_type=f32) + bf_ref[...]
    gate = jax.nn.sigmoid(zf[:, :Dp])
    val = zf[:, Dp:]
    mlp = jnp.dot((gate * val).astype(bf16), wmo_ref[...],
                  preferred_element_type=f32) + bmo_ref[...]

    # ---- Residual ----
    o_ref[...] = (x + mlp).reshape(Bt, L, Dp).astype(o_ref.dtype)


# ----------------------------- wrapper helpers -------------------------------

def _round_up(n, m):
    return ((n + m - 1) // m) * m


def _pad_last(a, width):
    pad = width - a.shape[-1]
    if pad == 0:
        return a
    return jnp.pad(a, [(0, 0)] * (a.ndim - 1) + [(0, pad)])


def _pad2(a, rows, cols):
    return jnp.pad(a, [(0, rows - a.shape[0]), (0, cols - a.shape[1])])


@functools.lru_cache(maxsize=1)
def _tpu_budgets():
    """(target_rows, activation_block_bytes, vmem_limit_bytes), generation-aware.

    v5e/v6e: 128 MiB VMEM per core -> bigger blocks, ~96 MiB scoped limit.
    v7x:     64 MiB shared by 2 TCs -> smaller blocks, <=48 MiB scoped limit.
    """
    try:
        vmem = int(pltpu.get_tpu_info().vmem_capacity_bytes)
    except Exception:
        vmem = 64 << 20                       # conservative fallback
    if vmem >= (96 << 20):                    # v5e / v6e class
        return 512, 16 << 20, 96 << 20
    return 256, 8 << 20, 48 << 20             # v7x class (or unknown)


def _probe_kernel(x_ref, o_ref):
    o_ref[...] = x_ref[...]


@functools.lru_cache(maxsize=1)
def _single_buffer_supported():
    """True if BlockSpec(pipeline_mode=pl.Buffered(1)) lowers on this backend.

    Grid-invariant weights are DMA'd once but double-buffered by default; single
    buffering halves their VMEM residency (matters at production D on v7x).
    """
    try:
        fn = pl.pallas_call(
            _probe_kernel,
            out_shape=jax.ShapeDtypeStruct((8, 128), jnp.float32),
            grid=(2,),
            in_specs=[pl.BlockSpec((8, 128), lambda i: (0, 0),
                                   pipeline_mode=pl.Buffered(1))],
            out_specs=pl.BlockSpec((8, 128), lambda i: (0, 0)),
            compiler_params=pltpu.CompilerParams(
                dimension_semantics=("parallel",)),
        )
        jax.jit(fn).lower(jax.ShapeDtypeStruct((8, 128), jnp.float32)).compile()
        return True
    except Exception:
        return False


def _weight_spec(shape, single_buffer):
    if single_buffer:
        return pl.BlockSpec(shape, lambda i: (0, 0), pipeline_mode=pl.Buffered(1))
    return pl.BlockSpec(shape, lambda i: (0, 0))


def _pick_bt(B, L, Dp, target_rows, max_block_bytes):
    """Batch elements packed per grid step (matmul M = Bt * L)."""
    if L % 8 != 0:
        return 1                      # keep (Bt, L, Dp) <-> (Bt*L, Dp) reshapes trivial
    cap_vmem = max(1, max_block_bytes // (L * Dp * 4))
    cap_rows = max(1, target_rows // L)
    bt = max(1, min(B, cap_vmem, cap_rows))
    if B >= 2:                        # >= 2 grid steps so both v7x TensorCores get work
        bt = min(bt, (B + 1) // 2)
    return bt


# ----------------------------- forward ---------------------------------------

@functools.partial(
    jax.jit,
    static_argnames=("single_buffer_weights", "target_rows", "max_block_bytes",
                     "vmem_limit"),
)
def _mamba_block_forward(x, params, *, single_buffer_weights, target_rows,
                         max_block_bytes, vmem_limit):
    (gamma, beta, convw, convb, wg, bg, wssm, bssm,
     wfg, bfg, wfv, bfv, wmo, bmo) = params
    B, L, D = x.shape
    Dp = _round_up(D, 128)
    f32, bf16 = jnp.float32, jnp.bfloat16

    # Lane-dense packing: zero-pad channels to a multiple of 128 (no-op when D%128==0);
    # matmul weights -> bf16 (half the DMA bytes, 2x MXU rate); biases / LN params f32.
    xp = _pad_last(x, Dp)
    gamma_p = _pad_last(gamma.astype(f32), Dp)
    beta_p = _pad_last(beta.astype(f32), Dp)

    # Conv weights stacked over the 3 taps, with the SSM gate projection folded in as
    # an extra 128-lane output block: col Dp carries convw_stacked @ W_g so the gate
    # logit comes straight out of the conv matmul.
    convw_s = jnp.concatenate(
        [_pad2(convw[k].astype(f32), Dp, Dp) for k in range(3)], axis=0)      # (3Dp, Dp)
    gcol = jnp.concatenate(
        [_pad2(convw[k].astype(f32) @ wg.astype(f32), Dp, 1) for k in range(3)], axis=0)
    gblock = jnp.pad(gcol, ((0, 0), (0, 127)))                                # (3Dp, 128)
    convw_ext = jnp.concatenate([convw_s, gblock], axis=1).astype(bf16)       # (3Dp, Dp+128)
    gbias = convb.astype(f32) @ wg.astype(f32) + bg.astype(f32)               # (1, 1)
    convb_ext = jnp.concatenate(
        [_pad_last(convb.astype(f32), Dp), _pad_last(gbias, 128)], axis=1)    # (1, Dp+128)

    wssm_p = _pad2(wssm.astype(f32), Dp, Dp).astype(bf16)
    bssm_p = _pad_last(bssm.astype(f32), Dp)
    wf_p = jnp.concatenate([_pad2(wfg.astype(f32), Dp, Dp),
                            _pad2(wfv.astype(f32), Dp, Dp)], axis=1).astype(bf16)
    bf_p = jnp.concatenate([_pad_last(bfg.astype(f32), Dp),
                            _pad_last(bfv.astype(f32), Dp)], axis=1)
    wmo_p = _pad2(wmo.astype(f32), Dp, Dp).astype(bf16)
    bmo_p = _pad_last(bmo.astype(f32), Dp)

    packed = (gamma_p, beta_p, convw_ext, convb_ext,
              wssm_p, bssm_p, wf_p, bf_p, wmo_p, bmo_p)

    # TODO(synk): at production D/L, additionally tile the DxD weights and the L axis
    # (carrying h + the chunk prefix product of a) to bound the v7x 64 MiB VMEM.
    Bt = _pick_bt(B, L, Dp, target_rows, max_block_bytes)
    nb = pl.cdiv(B, Bt)
    if nb * Bt != B:                 # ragged batch: pad instead of collapsing to Bt=1
        xp = jnp.pad(xp, ((0, nb * Bt - B), (0, 0), (0, 0)))

    act_spec = pl.BlockSpec((Bt, L, Dp), lambda i: (i, 0, 0))
    w_specs = [_weight_spec(p.shape, single_buffer_weights) for p in packed]

    out_p = pl.pallas_call(
        functools.partial(mamba_block_kernel, d_true=D),
        out_shape=jax.ShapeDtypeStruct((nb * Bt, L, Dp), x.dtype),
        grid=(nb,),
        in_specs=[act_spec] + w_specs,
        out_specs=pl.BlockSpec((Bt, L, Dp), lambda i: (i, 0, 0)),
        compiler_params=pltpu.CompilerParams(
            dimension_semantics=("parallel",),   # batch blocks are independent
            vmem_limit_bytes=vmem_limit,
        ),
    )(xp, *packed)
    return out_p[:B, :, :D]


def mamba_block_forward(x, params):
    target_rows, max_block_bytes, vmem_limit = _tpu_budgets()
    return _mamba_block_forward(
        x, params,
        single_buffer_weights=_single_buffer_supported(),
        target_rows=target_rows,
        max_block_bytes=max_block_bytes,
        vmem_limit=vmem_limit,
    )


# ----------------------------- references ------------------------------------

def ref_forward_f32(x, params):
    """Pure-f32 JAX reference with the PyTorch MambaBlock semantics."""
    (gamma, beta, convw, convb, wg, bg, wssm, bssm,
     wfg, bfg, wfv, bfv, wmo, bmo) = params
    B, L, D = x.shape
    mu = x.mean(-1, keepdims=True)
    var = ((x - mu) ** 2).mean(-1, keepdims=True)
    y = (x - mu) / jnp.sqrt(var + 1e-5) * gamma[0] + beta[0]
    ypad = jnp.pad(y, ((0, 0), (1, 1), (0, 0)))
    conv = (ypad[:, :-2] @ convw[0] + ypad[:, 1:-1] @ convw[1]
            + ypad[:, 2:] @ convw[2]) + convb[0]
    g = jax.nn.sigmoid(conv @ wg + bg[0, 0])             # (B, L, 1)

    def step(h, inp):
        gt, ct = inp
        h = (1.0 - gt) * h + gt * ct
        return h, h

    _, Hs = lax.scan(step, jnp.zeros((B, D), x.dtype),
                     (jnp.swapaxes(g, 0, 1), jnp.swapaxes(conv, 0, 1)))
    H = jnp.swapaxes(Hs, 0, 1)
    ssm = H @ wssm + bssm[0]
    gate = jax.nn.sigmoid(ssm @ wfg + bfg[0])
    val = ssm @ wfv + bfv[0]
    mlp = (gate * val) @ wmo + bmo[0]
    return x + mlp


def ref_forward_bf16(x, params):
    """Mirrors the kernel's plan: bf16 matmul operands, folded gate, f32 elsewhere."""
    (gamma, beta, convw, convb, wg, bg, wssm, bssm,
     wfg, bfg, wfv, bfv, wmo, bmo) = params
    f32, bf16 = jnp.float32, jnp.bfloat16
    B, L, D = x.shape
    mu = x.mean(-1, keepdims=True)
    xc = x - mu
    var = (xc * xc).mean(-1, keepdims=True)
    y = xc * lax.rsqrt(var + 1e-5) * gamma[0] + beta[0]
    zrow = jnp.zeros((B, 1, D), f32)
    y_prev = jnp.concatenate([zrow, y[:, :-1]], axis=1)
    y_next = jnp.concatenate([y[:, 1:], zrow], axis=1)
    ycat = jnp.concatenate([y_prev, y, y_next], axis=-1).astype(bf16)
    wstack = jnp.concatenate([convw[0], convw[1], convw[2]], axis=0)      # (3D, D)
    gcol = jnp.concatenate([convw[k] @ wg for k in range(3)], axis=0)     # (3D, 1)
    wext = jnp.concatenate([wstack, gcol], axis=1).astype(bf16)           # (3D, D+1)
    bext = jnp.concatenate([convb, convb @ wg + bg], axis=1)[0]           # (D+1,)
    z = jnp.einsum("blk,ke->ble", ycat, wext, preferred_element_type=f32) + bext
    conv = z[..., :D]
    g = jax.nn.sigmoid(z[..., D:])

    def step(h, inp):
        gt, ct = inp
        h = (1.0 - gt) * h + gt * ct
        return h, h

    _, Hs = lax.scan(step, jnp.zeros((B, D), f32),
                     (jnp.swapaxes(g, 0, 1), jnp.swapaxes(conv, 0, 1)))
    H = jnp.swapaxes(Hs, 0, 1)
    ssm = jnp.einsum("bld,de->ble", H.astype(bf16), wssm.astype(bf16),
                     preferred_element_type=f32) + bssm[0]
    wf = jnp.concatenate([wfg, wfv], axis=1).astype(bf16)
    bfc = jnp.concatenate([bfg, bfv], axis=1)[0]
    zf = jnp.einsum("bld,de->ble", ssm.astype(bf16), wf,
                    preferred_element_type=f32) + bfc
    gate = jax.nn.sigmoid(zf[..., :D])
    val = zf[..., D:]
    mlp = jnp.einsum("bld,de->ble", (gate * val).astype(bf16), wmo.astype(bf16),
                     preferred_element_type=f32) + bmo[0]
    return x + mlp


if __name__ == "__main__":
    B, L, D = 2, 8, 32

    key = jax.random.PRNGKey(0)
    keys = jax.random.split(key, 14)

    def init(k, shape, scale=0.1):
        return scale * jax.random.normal(k, shape, jnp.float32)

    params = (
        jnp.ones((1, D), jnp.float32),       # LayerNorm weight (gamma)
        jnp.zeros((1, D), jnp.float32),      # LayerNorm bias   (beta)
        init(keys[1], (3, D, D)),            # conv weight, convw[k] = W_torch[:, :, k].T
        init(keys[2], (1, D)),               # conv bias
        init(keys[3], (D, 1)),               # W_g.T
        init(keys[4], (1, 1)),               # b_g
        init(keys[5], (D, D)),               # W_out.T (SSM)
        init(keys[6], (1, D)),               # b_out   (SSM)
        init(keys[7], (D, D)),               # fc gate half  (W_fc[:D].T)
        init(keys[8], (1, D)),               # fc gate bias
        init(keys[9], (D, D)),               # fc value half (W_fc[D:].T)
        init(keys[10], (1, D)),              # fc value bias
        init(keys[11], (D, D)),              # MLP out weight.T
        init(keys[12], (1, D)),              # MLP out bias
    )

    x = jax.random.normal(keys[0], (B, L, D), jnp.float32)

    out = jax.block_until_ready(mamba_block_forward(x, params))
    assert out.shape == (B, L, D)

    ref_exact = ref_forward_bf16(x, params)   # same bf16-matmul / folded-gate plan
    ref_full = ref_forward_f32(x, params)     # pure-f32 PyTorch semantics

    err_exact = float(jnp.max(jnp.abs(out - ref_exact)))
    err_full = float(jnp.max(jnp.abs(out - ref_full)))
    assert err_exact < 2e-3, f"mismatch vs bf16-mirror reference: max abs err = {err_exact:e}"
    assert err_full < 5e-2, f"mismatch vs f32 reference: max abs err = {err_full:e}"

    print("KERNEL_OK")
</pallas_src>

<mosaic_0001>
module attributes {stable_mosaic.version = 11 : i64} {
  func.func @mamba_block_kernel(%arg0: i32, %arg1: memref<1x8x128xf32, #tpu.memory_space<vmem>>, %arg2: memref<1x128xf32, #tpu.memory_space<vmem>>, %arg3: memref<1x128xf32, #tpu.memory_space<vmem>>, %arg4: memref<384x256xbf16, #tpu.memory_space<vmem>>, %arg5: memref<1x256xf32, #tpu.memory_space<vmem>>, %arg6: memref<128x128xbf16, #tpu.memory_space<vmem>>, %arg7: memref<1x128xf32, #tpu.memory_space<vmem>>, %arg8: memref<128x256xbf16, #tpu.memory_space<vmem>>, %arg9: memref<1x256xf32, #tpu.memory_space<vmem>>, %arg10: memref<128x128xbf16, #tpu.memory_space<vmem>>, %arg11: memref<1x128xf32, #tpu.memory_space<vmem>>, %arg12: memref<1x8x128xf32, #tpu.memory_space<vmem>>) attributes {dimension_semantics = [#tpu.dimension_semantics<parallel>], iteration_bounds = array<i64: 2>, scalar_prefetch = 0 : i64, scratch_operands = 0 : i64, tpu.core_type = #tpu.core_type<tc>, window_params = [{transform_indices = @transform_0, window_bounds = array<i64: 1, 8, 128>}, {pipeline_mode = #tpu.pipeline_mode<synchronous>, transform_indices = @transform_1, window_bounds = array<i64: 1, 128>}, {pipeline_mode = #tpu.pipeline_mode<synchronous>, transform_indices = @transform_2, window_bounds = array<i64: 1, 128>}, {pipeline_mode = #tpu.pipeline_mode<synchronous>, transform_indices = @transform_3, window_bounds = array<i64: 384, 256>}, {pipeline_mode = #tpu.pipeline_mode<synchronous>, transform_indices = @transform_4, window_bounds = array<i64: 1, 256>}, {pipeline_mode = #tpu.pipeline_mode<synchronous>, transform_indices = @transform_5, window_bounds = array<i64: 128, 128>}, {pipeline_mode = #tpu.pipeline_mode<synchronous>, transform_indices = @transform_6, window_bounds = array<i64: 1, 128>}, {pipeline_mode = #tpu.pipeline_mode<synchronous>, transform_indices = @transform_7, window_bounds = array<i64: 128, 256>}, {pipeline_mode = #tpu.pipeline_mode<synchronous>, transform_indices = @transform_8, window_bounds = array<i64: 1, 256>}, {pipeline_mode = #tpu.pipeline_mode<synchronous>, transform_indices = @transform_9, window_bounds = array<i64: 128, 128>}, {pipeline_mode = #tpu.pipeline_mode<synchronous>, transform_indices = @transform_10, window_bounds = array<i64: 1, 128>}, {transform_indices = @transform_11, window_bounds = array<i64: 1, 8, 128>}]} {
    %c0 = arith.constant 0 : index
    %c0_0 = arith.constant 0 : index
    %c0_1 = arith.constant 0 : index
    %0 = vector.load %arg1[%c0, %c0_0, %c0_1] : memref<1x8x128xf32, #tpu.memory_space<vmem>>, vector<1x8x128xf32>
    %1 = vector.shape_cast %0 : vector<1x8x128xf32> to vector<8x128xf32>
    %cst = arith.constant dense<0.000000e+00> : vector<8xf32>
    %2 = vector.multi_reduction <add>, %1, %cst [1] : vector<8x128xf32> to vector<8xf32>
    %3 = vector.shape_cast %2 : vector<8xf32> to vector<8x1xf32>
    %cst_2 = arith.constant 3.125000e-02 : f32
    %4 = vector.broadcast %cst_2 : f32 to vector<8x1xf32>
    %5 = arith.mulf %3, %4 : vector<8x1xf32>
    %6 = vector.broadcast %5 : vector<8x1xf32> to vector<8x128xf32>
    %7 = arith.subf %1, %6 : vector<8x128xf32>
    %8 = tpu.iota {dimensions = array<i32: 1>} : vector<1x128xi32>
    %c32_i32 = arith.constant 32 : i32
    %9 = vector.broadcast %c32_i32 : i32 to vector<1x128xi32>
    %10 = arith.cmpi slt, %8, %9 : vector<1x128xi32>
    %cst_3 = arith.constant 0.000000e+00 : f32
    %11 = vector.shape_cast %10 : vector<1x128xi1> to vector<1x128xi1>
    %12 = vector.broadcast %11 : vector<1x128xi1> to vector<8x128xi1>
    %13 = vector.broadcast %cst_3 : f32 to vector<8x128xf32>
    %14 = arith.select %12, %7, %13 : vector<8x128xi1>, vector<8x128xf32>
    %15 = arith.mulf %14, %14 : vector<8x128xf32>
    %cst_4 = arith.constant dense<0.000000e+00> : vector<8xf32>
    %16 = vector.multi_reduction <add>, %15, %cst_4 [1] : vector<8x128xf32> to vector<8xf32>
    %17 = vector.shape_cast %16 : vector<8xf32> to vector<8x1xf32>
    %cst_5 = arith.constant 3.125000e-02 : f32
    %18 = vector.broadcast %cst_5 : f32 to vector<8x1xf32>
    %19 = arith.mulf %17, %18 : vector<8x1xf32>
    %cst_6 = arith.constant 9.99999974E-6 : f32
    %20 = vector.broadcast %cst_6 : f32 to vector<8x1xf32>
    %21 = arith.addf %19, %20 : vector<8x1xf32>
    %22 = math.rsqrt %21 : vector<8x1xf32>
    %23 = vector.broadcast %22 : vector<8x1xf32> to vector<8x128xf32>
    %24 = arith.mulf %14, %23 : vector<8x128xf32>
    %c0_7 = arith.constant 0 : index
    %c0_8 = arith.constant 0 : index
    %25 = vector.load %arg2[%c0_7, %c0_8] : memref<1x128xf32, #tpu.memory_space<vmem>>, vector<1x128xf32>
    %26 = vector.broadcast %25 : vector<1x128xf32> to vector<8x128xf32>
    %27 = arith.mulf %24, %26 : vector<8x128xf32>
    %c0_9 = arith.constant 0 : index
    %c0_10 = arith.constant 0 : index
    %28 = vector.load %arg3[%c0_9, %c0_10] : memref<1x128xf32, #tpu.memory_space<vmem>>, vector<1x128xf32>
    %29 = vector.broadcast %28 : vector<1x128xf32> to vector<8x128xf32>
    %30 = arith.addf %27, %29 : vector<8x128xf32>
    %31 = vector.shape_cast %30 : vector<8x128xf32> to vector<1x8x128xf32>
    %cst_11 = arith.constant 0.000000e+00 : f32
    %32 = vector.broadcast %cst_11 : f32 to vector<1x1x128xf32>
    %33 = vector.extract_strided_slice %31 {offsets = [0, 0, 0], sizes = [1, 7, 128], strides = [1, 1, 1]} : vector<1x8x128xf32> to vector<1x7x128xf32>
    %34 = tpu.concatenate %32, %33 in 1 : vector<1x1x128xf32>, vector<1x7x128xf32> -> vector<1x8x128xf32>
    %35 = vector.extract_strided_slice %31 {offsets = [0, 1, 0], sizes = [1, 7, 128], strides = [1, 1, 1]} : vector<1x8x128xf32> to vector<1x7x128xf32>
    %36 = tpu.concatenate %35, %32 in 1 : vector<1x7x128xf32>, vector<1x1x128xf32> -> vector<1x8x128xf32>
    %37 = arith.truncf %34 : vector<1x8x128xf32> to vector<1x8x128xbf16>
    %38 = arith.truncf %31 : vector<1x8x128xf32> to vector<1x8x128xbf16>
    %39 = arith.truncf %36 : vector<1x8x128xf32> to vector<1x8x128xbf16>
    %40 = tpu.concatenate %37, %38, %39 in 2 : vector<1x8x128xbf16>, vector<1x8x128xbf16>, vector<1x8x128xbf16> -> vector<1x8x384xbf16>
    %41 = vector.shape_cast %40 : vector<1x8x384xbf16> to vector<8x384xbf16>
    %c0_12 = arith.constant 0 : index
    %c0_13 = arith.constant 0 : index
    %42 = vector.load %arg4[%c0_12, %c0_13] : memref<384x256xbf16, #tpu.memory_space<vmem>>, vector<384x256xbf16>
    %cst_14 = arith.constant dense<0.000000e+00> : vector<8x256xf32>
    %43 = tpu.matmul %41, %42, %cst_14 {dimension_numbers = #tpu.dot_dimension_numbers<[1], [0], [0], [1], [0, 0, 1, 1], [], []>} : vector<8x384xbf16>, vector<384x256xbf16>, vector<8x256xf32> -> vector<8x256xf32>
    %c0_15 = arith.constant 0 : index
    %c0_16 = arith.constant 0 : index
    %44 = vector.load %arg5[%c0_15, %c0_16] : memref<1x256xf32, #tpu.memory_space<vmem>>, vector<1x256xf32>
    %45 = vector.broadcast %44 : vector<1x256xf32> to vector<8x256xf32>
    %46 = arith.addf %43, %45 : vector<8x256xf32>
    %47 = vector.extract_strided_slice %46 {offsets = [0, 0], sizes = [8, 128], strides = [1, 1]} : vector<8x256xf32> to vector<8x128xf32>
    %48 = vector.extract_strided_slice %46 {offsets = [0, 128], sizes = [8, 1], strides = [1, 1]} : vector<8x256xf32> to vector<8x1xf32>
    %49 = arith.negf %48 : vector<8x1xf32>
    %50 = math.exp %49 : vector<8x1xf32>
    %cst_17 = arith.constant 1.000000e+00 : f32
    %51 = vector.broadcast %cst_17 : f32 to vector<8x1xf32>
    %52 = arith.addf %51, %50 : vector<8x1xf32>
    %53 = arith.divf %51, %52 : vector<8x1xf32>
    %54 = tpu.iota {dimensions = array<i32: 1>} : vector<1x8x1xi32>
    %55 = vector.shape_cast %54 : vector<1x8x1xi32> to vector<8x1xi32>
    %cst_18 = arith.constant 1.000000e+00 : f32
    %56 = vector.broadcast %cst_18 : f32 to vector<8x1xf32>
    %57 = arith.subf %56, %53 : vector<8x1xf32>
    %58 = vector.broadcast %53 : vector<8x1xf32> to vector<8x128xf32>
    %59 = arith.mulf %58, %47 : vector<8x128xf32>
    %c1_i32 = arith.constant 1 : i32
    %60 = vector.broadcast %c1_i32 : i32 to vector<8x1xi32>
    %61 = arith.cmpi sge, %55, %60 : vector<8x1xi32>
    %c1_i32_19 = arith.constant 1 : i32
    %62 = tpu.dynamic_rotate %57 by %c1_i32_19 dim 0 : vector<8x1xf32>, i32 -> vector<8x1xf32>
    %cst_20 = arith.constant 1.000000e+00 : f32
    %63 = vector.broadcast %cst_20 : f32 to vector<8x1xf32>
    %64 = arith.select %61, %62, %63 : vector<8x1xi1>, vector<8x1xf32>
    %c1_i32_21 = arith.constant 1 : i32
    %65 = tpu.dynamic_rotate %59 by %c1_i32_21 dim 0 : vector<8x128xf32>, i32 -> vector<8x128xf32>
    %cst_22 = arith.constant 0.000000e+00 : f32
    %66 = vector.shape_cast %61 : vector<8x1xi1> to vector<8x1xi1>
    %67 = vector.broadcast %66 : vector<8x1xi1> to vector<8x128xi1>
    %68 = vector.broadcast %cst_22 : f32 to vector<8x128xf32>
    %69 = arith.select %67, %65, %68 : vector<8x128xi1>, vector<8x128xf32>
    %70 = vector.broadcast %57 : vector<8x1xf32> to vector<8x128xf32>
    %71 = arith.mulf %70, %69 : vector<8x128xf32>
    %72 = arith.addf %71, %59 : vector<8x128xf32>
    %73 = arith.mulf %57, %64 : vector<8x1xf32>
    %c2_i32 = arith.constant 2 : i32
    %74 = vector.broadcast %c2_i32 : i32 to vector<8x1xi32>
    %75 = arith.cmpi sge, %55, %74 : vector<8x1xi32>
    %c2_i32_23 = arith.constant 2 : i32
    %76 = tpu.dynamic_rotate %73 by %c2_i32_23 dim 0 : vector<8x1xf32>, i32 -> vector<8x1xf32>
    %cst_24 = arith.constant 1.000000e+00 : f32
    %77 = vector.broadcast %cst_24 : f32 to vector<8x1xf32>
    %78 = arith.select %75, %76, %77 : vector<8x1xi1>, vector<8x1xf32>
    %c2_i32_25 = arith.constant 2 : i32
    %79 = tpu.dynamic_rotate %72 by %c2_i32_25 dim 0 : vector<8x128xf32>, i32 -> vector<8x128xf32>
    %cst_26 = arith.constant 0.000000e+00 : f32
    %80 = vector.shape_cast %75 : vector<8x1xi1> to vector<8x1xi1>
    %81 = vector.broadcast %80 : vector<8x1xi1> to vector<8x128xi1>
    %82 = vector.broadcast %cst_26 : f32 to vector<8x128xf32>
    %83 = arith.select %81, %79, %82 : vector<8x128xi1>, vector<8x128xf32>
    %84 = vector.broadcast %73 : vector<8x1xf32> to vector<8x128xf32>
    %85 = arith.mulf %84, %83 : vector<8x128xf32>
    %86 = arith.addf %85, %72 : vector<8x128xf32>
    %87 = arith.mulf %73, %78 : vector<8x1xf32>
    %c4_i32 = arith.constant 4 : i32
    %88 = vector.broadcast %c4_i32 : i32 to vector<8x1xi32>
    %89 = arith.cmpi sge, %55, %88 : vector<8x1xi32>
    %c4_i32_27 = arith.constant 4 : i32
    %90 = tpu.dynamic_rotate %86 by %c4_i32_27 dim 0 : vector<8x128xf32>, i32 -> vector<8x128xf32>
    %cst_28 = arith.constant 0.000000e+00 : f32
    %91 = vector.shape_cast %89 : vector<8x1xi1> to vector<8x1xi1>
    %92 = vector.broadcast %91 : vector<8x1xi1> to vector<8x128xi1>
    %93 = vector.broadcast %cst_28 : f32 to vector<8x128xf32>
    %94 = arith.select %92, %90, %93 : vector<8x128xi1>, vector<8x128xf32>
    %95 = vector.broadcast %87 : vector<8x1xf32> to vector<8x128xf32>
    %96 = arith.mulf %95, %94 : vector<8x128xf32>
    %97 = arith.addf %96, %86 : vector<8x128xf32>
    %98 = arith.truncf %97 : vector<8x128xf32> to vector<8x128xbf16>
    %c0_29 = arith.constant 0 : index
    %c0_30 = arith.constant 0 : index
    %99 = vector.load %arg6[%c0_29, %c0_30] : memref<128x128xbf16, #tpu.memory_space<vmem>>, vector<128x128xbf16>
    %cst_31 = arith.constant dense<0.000000e+00> : vector<8x128xf32>
    %100 = tpu.matmul %98, %99, %cst_31 {dimension_numbers = #tpu.dot_dimension_numbers<[1], [0], [0], [1], [0, 0, 1, 1], [], []>} : vector<8x128xbf16>, vector<128x128xbf16>, vector<8x128xf32> -> vector<8x128xf32>
    %c0_32 = arith.constant 0 : index
    %c0_33 = arith.constant 0 : index
    %101 = vector.load %arg7[%c0_32, %c0_33] : memref<1x128xf32, #tpu.memory_space<vmem>>, vector<1x128xf32>
    %102 = vector.broadcast %101 : vector<1x128xf32> to vector<8x128xf32>
    %103 = arith.addf %100, %102 : vector<8x128xf32>
    %104 = arith.truncf %103 : vector<8x128xf32> to vector<8x128xbf16>
    %c0_34 = arith.constant 0 : index
    %c0_35 = arith.constant 0 : index
    %105 = vector.load %arg8[%c0_34, %c0_35] : memref<128x256xbf16, #tpu.memory_space<vmem>>, vector<128x256xbf16>
    %cst_36 = arith.constant dense<0.000000e+00> : vector<8x256xf32>
    %106 = tpu.matmul %104, %105, %cst_36 {dimension_numbers = #tpu.dot_dimension_numbers<[1], [0], [0], [1], [0, 0, 1, 1], [], []>} : vector<8x128xbf16>, vector<128x256xbf16>, vector<8x256xf32> -> vector<8x256xf32>
    %c0_37 = arith.constant 0 : index
    %c0_38 = arith.constant 0 : index
    %107 = vector.load %arg9[%c0_37, %c0_38] : memref<1x256xf32, #tpu.memory_space<vmem>>, vector<1x256xf32>
    %108 = vector.broadcast %107 : vector<1x256xf32> to vector<8x256xf32>
    %109 = arith.addf %106, %108 : vector<8x256xf32>
    %110 = vector.extract_strided_slice %109 {offsets = [0, 0], sizes = [8, 128], strides = [1, 1]} : vector<8x256xf32> to vector<8x128xf32>
    %111 = arith.negf %110 : vector<8x128xf32>
    %112 = math.exp %111 : vector<8x128xf32>
    %cst_39 = arith.constant 1.000000e+00 : f32
    %113 = vector.broadcast %cst_39 : f32 to vector<8x128xf32>
    %114 = arith.addf %113, %112 : vector<8x128xf32>
    %115 = arith.divf %113, %114 : vector<8x128xf32>
    %116 = vector.extract_strided_slice %109 {offsets = [0, 128], sizes = [8, 128], strides = [1, 1]} : vector<8x256xf32> to vector<8x128xf32>
    %117 = arith.mulf %115, %116 : vector<8x128xf32>
    %118 = arith.truncf %117 : vector<8x128xf32> to vector<8x128xbf16>
    %c0_40 = arith.constant 0 : index
    %c0_41 = arith.constant 0 : index
    %119 = vector.load %arg10[%c0_40, %c0_41] : memref<128x128xbf16, #tpu.memory_space<vmem>>, vector<128x128xbf16>
    %cst_42 = arith.constant dense<0.000000e+00> : vector<8x128xf32>
    %120 = tpu.matmul %118, %119, %cst_42 {dimension_numbers = #tpu.dot_dimension_numbers<[1], [0], [0], [1], [0, 0, 1, 1], [], []>} : vector<8x128xbf16>, vector<128x128xbf16>, vector<8x128xf32> -> vector<8x128xf32>
    %c0_43 = arith.constant 0 : index
    %c0_44 = arith.constant 0 : index
    %121 = vector.load %arg11[%c0_43, %c0_44] : memref<1x128xf32, #tpu.memory_space<vmem>>, vector<1x128xf32>
    %122 = vector.broadcast %121 : vector<1x128xf32> to vector<8x128xf32>
    %123 = arith.addf %120, %122 : vector<8x128xf32>
    %124 = arith.addf %1, %123 : vector<8x128xf32>
    %125 = vector.shape_cast %124 : vector<8x128xf32> to vector<1x8x128xf32>
    %c0_45 = arith.constant 0 : index
    %c0_46 = arith.constant 0 : index
    %c0_47 = arith.constant 0 : index
    %126 = vector.load %arg12[%c0_45, %c0_46, %c0_47] : memref<1x8x128xf32, #tpu.memory_space<vmem>>, vector<1x8x128xf32>
    tpu.vector_store %arg12[%c0_45, %c0_46, %c0_47], %125 {strides = array<i32>} : memref<1x8x128xf32, #tpu.memory_space<vmem>>, vector<1x8x128xf32>,
    return
  }
  func.func @transform_0(%arg0: i32) -> (i32, i32, i32) {
    %c0_i32 = arith.constant 0 : i32
    %c0_i32_0 = arith.constant 0 : i32
    %c0_i32_1 = arith.constant 0 : i32
    return %arg0, %c0_i32, %c0_i32_0 : i32, i32, i32
  }
  func.func @transform_1(%arg0: i32) -> (i32, i32) {
    %c0_i32 = arith.constant 0 : i32
    %c0_i32_0 = arith.constant 0 : i32
    %c0_i32_1 = arith.constant 0 : i32
    return %c0_i32, %c0_i32_0 : i32, i32
  }
  func.func @transform_2(%arg0: i32) -> (i32, i32) {
    %c0_i32 = arith.constant 0 : i32
    %c0_i32_0 = arith.constant 0 : i32
    %c0_i32_1 = arith.constant 0 : i32
    return %c0_i32, %c0_i32_0 : i32, i32
  }
  func.func @transform_3(%arg0: i32) -> (i32, i32) {
    %c0_i32 = arith.constant 0 : i32
    %c0_i32_0 = arith.constant 0 : i32
    %c0_i32_1 = arith.constant 0 : i32
    return %c0_i32, %c0_i32_0 : i32, i32
  }
  func.func @transform_4(%arg0: i32) -> (i32, i32) {
    %c0_i32 = arith.constant 0 : i32
    %c0_i32_0 = arith.constant 0 : i32
    %c0_i32_1 = arith.constant 0 : i32
    return %c0_i32, %c0_i32_0 : i32, i32
  }
  func.func @transform_5(%arg0: i32) -> (i32, i32) {
    %c0_i32 = arith.constant 0 : i32
    %c0_i32_0 = arith.constant 0 : i32
    %c0_i32_1 = arith.constant 0 : i32
    return %c0_i32, %c0_i32_0 : i32, i32
  }
  func.func @transform_6(%arg0: i32) -> (i32, i32) {
    %c0_i32 = arith.constant 0 : i32
    %c0_i32_0 = arith.constant 0 : i32
    %c0_i32_1 = arith.constant 0 : i32
    return %c0_i32, %c0_i32_0 : i32, i32
  }
  func.func @transform_7(%arg0: i32) -> (i32, i32) {
    %c0_i32 = arith.constant 0 : i32
    %c0_i32_0 = arith.constant 0 : i32
    %c0_i32_1 = arith.constant 0 : i32
    return %c0_i32, %c0_i32_0 : i32, i32
  }
  func.func @transform_8(%arg0: i32) -> (i32, i32) {
    %c0_i32 = arith.constant 0 : i32
    %c0_i32_0 = arith.constant 0 : i32
    %c0_i32_1 = arith.constant 0 : i32
    return %c0_i32, %c0_i32_0 : i32, i32
  }
  func.func @transform_9(%arg0: i32) -> (i32, i32) {
    %c0_i32 = arith.constant 0 : i32
    %c0_i32_0 = arith.constant 0 : i32
    %c0_i32_1 = arith.constant 0 : i32
    return %c0_i32, %c0_i32_0 : i32, i32
  }
  func.func @transform_10(%arg0: i32) -> (i32, i32) {
    %c0_i32 = arith.constant 0 : i32
    %c0_i32_0 = arith.constant 0 : i32
    %c0_i32_1 = arith.constant 0 : i32
    return %c0_i32, %c0_i32_0 : i32, i32
  }
  func.func @transform_11(%arg0: i32) -> (i32, i32, i32) {
    %c0_i32 = arith.constant 0 : i32
    %c0_i32_0 = arith.constant 0 : i32
    %c0_i32_1 = arith.constant 0 : i32
    return %arg0, %c0_i32, %c0_i32_0 : i32, i32, i32
  }
}

</mosaic_0001>

<llo_original>
// kernel: _mamba_block_forward.1
$region0: #{_mamba_block_forward.1}
  #allocation0 [shape = 'u32[]', space=smem, size = 0x4, offset = 0x4, fixed_abs, tag = 'smem constant byte address 0x4 - core index']
  #allocation1 [shape = 'u32[144,128]{1,0:T(1,128)}', space=vmem, size = 0x12000, scoped, tag = 'internal scratch']
  %s0 = inlined_call_operand.vmem [shape: f32[2,8,128], index: 0, kind: input, shape index: {}]
  %s1 = inlined_call_operand.vmem [shape: f32[1,128], index: 1, kind: input, shape index: {}]
  %s2 = inlined_call_operand.vmem [shape: f32[1,128], index: 2, kind: input, shape index: {}]
  %s3 = inlined_call_operand.vmem [shape: bf16[384,256], index: 3, kind: input, shape index: {}]
  %s4 = inlined_call_operand.vmem [shape: f32[1,256], index: 4, kind: input, shape index: {}]
  %s5 = inlined_call_operand.vmem [shape: bf16[128,128], index: 5, kind: input, shape index: {}]
  %s6 = inlined_call_operand.vmem [shape: f32[1,128], index: 6, kind: input, shape index: {}]
  %s7 = inlined_call_operand.vmem [shape: bf16[128,256], index: 7, kind: input, shape index: {}]
  %s8 = inlined_call_operand.vmem [shape: f32[1,256], index: 8, kind: input, shape index: {}]
  %s9 = inlined_call_operand.vmem [shape: bf16[128,128], index: 9, kind: input, shape index: {}]
  %s10 = inlined_call_operand.vmem [shape: f32[1,128], index: 10, kind: input, shape index: {}]
  %s11 = inlined_call_operand.hbm [shape: f32[2,8,128], index: 11, kind: output, shape index: {}]
  %s12 = sld [smem:[#allocation0]]
  $region77: #{_mamba_block_forward.1} parent=0
    _
  %s14 = ssub.s32 1, %s12
  %s15 = scalar_select 0, %s14, %s12
  $region1: #{_mamba_block_forward.1} parent=0
    #allocation2 [shape = 'u8[8192]{0}', space=vmem, size = 0x2000, scoped, tag = 'output window, operand 0']
    #allocation3 [shape = 's32[2]{0}', space=sflag, size = 0x8, scoped, tag = 'scoped memory for _mamba_block_forward.1']
    %16 = vsyncpa [#allocation3], 0
    %s17 = scalar_lea.sflag [#allocation3], 1
    %18 = vsyncpa %s17, 0
    loop: start=0, step=1, limit=4
    $region2: #{_mamba_block_forward.1} parent=1 // loop_pre_header
      _
    $region3: #{_mamba_block_forward.1} parent=1 // loop_header
      %s20 = sphi 0, %s24
      %p21 = scmp.ge.s32.totalorder %s20, 4
      %s30 = sphi 0, %s32
      %s33 = sphi 0, %s30
      %s34 = sphi 0, %s33
      %s50 = sphi 0, %s34
      %s54 = sphi 0, %s54
      %s56 = sphi 0, %s54
      %s57 = sphi 0, %s56
      %s71 = sphi 0, %s57
      %s75 = sphi 0, %s75
      %s77 = sphi 0, %s75
      %s78 = sphi 0, %s77
      %s92 = sphi 0, %s78
      %s96 = sphi 0, %s96
      %s98 = sphi 0, %s96
      %s99 = sphi 0, %s98
      %s113 = sphi 0, %s99
      %s117 = sphi 0, %s117
      %s119 = sphi 0, %s117
      %s120 = sphi 0, %s119
      %s134 = sphi 0, %s120
      %s138 = sphi 0, %s138
      %s140 = sphi 0, %s138
      %s141 = sphi 0, %s140
      %s155 = sphi 0, %s141
      %s159 = sphi 0, %s159
      %s161 = sphi 0, %s159
      %s162 = sphi 0, %s161
      %s176 = sphi 0, %s162
      %s180 = sphi 0, %s180
      %s182 = sphi 0, %s180
      %s183 = sphi 0, %s182
      %s197 = sphi 0, %s183
      %s201 = sphi 0, %s201
      %s203 = sphi 0, %s201
      %s204 = sphi 0, %s203
      %s218 = sphi 0, %s204
      %s222 = sphi 0, %s222
      %s224 = sphi 0, %s222
      %s225 = sphi 0, %s224
      %s239 = sphi 0, %s225
      %s243 = sphi 0, %s243
      %s245 = sphi 0, %s243
      %s246 = sphi 0, %s245
      %s260 = sphi 0, %s246
      %s266 = sphi 0, %s268
      %s269 = sphi 0, %s266
      %s270 = sphi 0, %s269
      %s286 = sphi 0, %s270
    $region4: #{_mamba_block_forward.1} parent=1 // loop_header_branch
      %23 = sbr.rel (%p21) target = $region8
    $region5: #{_mamba_block_forward.1} parent=1 // loop_body
      %s25 = ssub.s32 %s20, 1
      %s26 = ssub.s32 %s20, 2
      %s27 = sadd.s32 %s20, 1
      %s28 = ssub.s32 %s20, %s27
      %p29 = scmp.eq.s32.totalorder %s28, 0
      %s31 = sadd.s32 %s30, 1
      %s32 = scalar_select %p29, %s30, %s31
      %p35 = pneg %p29
      %p36 = scmp.eq.s32.totalorder %s20, 1
      %p37 = por %p35, %p36
      %p38 = scmp.ne.s32.totalorder %s30, %s33
      %p39 = scmp.eq.s32.totalorder %s20, 0
      %p40 = por %p38, %p39
      %p41 = scmp.ne.s32.totalorder %s30, %s33
      %p42 = scmp.eq.s32.totalorder %s25, 1
      %p43 = por %p41, %p42
      %p44 = scmp.ne.s32.totalorder %s33, %s34
      %p45 = scmp.eq.s32.totalorder %s25, 0
      %p46 = por %p44, %p45
      %p47 = scmp.ne.s32.totalorder %s33, %s34
      %p48 = scmp.eq.s32.totalorder %s26, 1
      %p49 = por %p47, %p48
      %p51 = scmp.ne.s32.totalorder %s34, %s50
      %p52 = scmp.eq.s32.totalorder %s26, 0
      %p53 = por %p51, %p52
      %s55 = sadd.s32 %s54, 1
      %p58 = scmp.eq.s32.totalorder %s20, 1
      %p59 = scmp.ne.s32.totalorder %s54, %s56
      %p60 = scmp.eq.s32.totalorder %s20, 0
      %p61 = por %p59, %p60
      %p62 = scmp.ne.s32.totalorder %s54, %s56
      %p63 = scmp.eq.s32.totalorder %s25, 1
      %p64 = por %p62, %p63
      %p65 = scmp.ne.s32.totalorder %s56, %s57
      %p66 = scmp.eq.s32.totalorder %s25, 0
      %p67 = por %p65, %p66
      %p68 = scmp.ne.s32.totalorder %s56, %s57
      %p69 = scmp.eq.s32.totalorder %s26, 1
      %p70 = por %p68, %p69
      %p72 = scmp.ne.s32.totalorder %s57, %s71
      %p73 = scmp.eq.s32.totalorder %s26, 0
      %p74 = por %p72, %p73
      %s76 = sadd.s32 %s75, 1
      %p79 = scmp.eq.s32.totalorder %s20, 1
      %p80 = scmp.ne.s32.totalorder %s75, %s77
      %p81 = scmp.eq.s32.totalorder %s20, 0
      %p82 = por %p80, %p81
      %p83 = scmp.ne.s32.totalorder %s75, %s77
      %p84 = scmp.eq.s32.totalorder %s25, 1
      %p85 = por %p83, %p84
      %p86 = scmp.ne.s32.totalorder %s77, %s78
      %p87 = scmp.eq.s32.totalorder %s25, 0
      %p88 = por %p86, %p87
      %p89 = scmp.ne.s32.totalorder %s77, %s78
      %p90 = scmp.eq.s32.totalorder %s26, 1
      %p91 = por %p89, %p90
      %p93 = scmp.ne.s32.totalorder %s78, %s92
      %p94 = scmp.eq.s32.totalorder %s26, 0
      %p95 = por %p93, %p94
      %s97 = sadd.s32 %s96, 1
      %p100 = scmp.eq.s32.totalorder %s20, 1
      %p101 = scmp.ne.s32.totalorder %s96, %s98
      %p102 = scmp.eq.s32.totalorder %s20, 0
      %p103 = por %p101, %p102
      %p104 = scmp.ne.s32.totalorder %s96, %s98
      %p105 = scmp.eq.s32.totalorder %s25, 1
      %p106 = por %p104, %p105
      %p107 = scmp.ne.s32.totalorder %s98, %s99
      %p108 = scmp.eq.s32.totalorder %s25, 0
      %p109 = por %p107, %p108
      %p110 = scmp.ne.s32.totalorder %s98, %s99
      %p111 = scmp.eq.s32.totalorder %s26, 1
      %p112 = por %p110, %p111
      %p114 = scmp.ne.s32.totalorder %s99, %s113
      %p115 = scmp.eq.s32.totalorder %s26, 0
      %p116 = por %p114, %p115
      %s118 = sadd.s32 %s117, 1
      %p121 = scmp.eq.s32.totalorder %s20, 1
      %p122 = scmp.ne.s32.totalorder %s117, %s119
      %p123 = scmp.eq.s32.totalorder %s20, 0
      %p124 = por %p122, %p123
      %p125 = scmp.ne.s32.totalorder %s117, %s119
      %p126 = scmp.eq.s32.totalorder %s25, 1
      %p127 = por %p125, %p126
      %p128 = scmp.ne.s32.totalorder %s119, %s120
      %p129 = scmp.eq.s32.totalorder %s25, 0
      %p130 = por %p128, %p129
      %p131 = scmp.ne.s32.totalorder %s119, %s120
      %p132 = scmp.eq.s32.totalorder %s26, 1
      %p133 = por %p131, %p132
      %p135 = scmp.ne.s32.totalorder %s120, %s134
      %p136 = scmp.eq.s32.totalorder %s26, 0
      %p137 = por %p135, %p136
      %s139 = sadd.s32 %s138, 1
      %p142 = scmp.eq.s32.totalorder %s20, 1
      %p143 = scmp.ne.s32.totalorder %s138, %s140
      %p144 = scmp.eq.s32.totalorder %s20, 0
      %p145 = por %p143, %p144
      %p146 = scmp.ne.s32.totalorder %s138, %s140
      %p147 = scmp.eq.s32.totalorder %s25, 1
      %p148 = por %p146, %p147
      %p149 = scmp.ne.s32.totalorder %s140, %s141
      %p150 = scmp.eq.s32.totalorder %s25, 0
      %p151 = por %p149, %p150
      %p152 = scmp.ne.s32.totalorder %s140, %s141
      %p153 = scmp.eq.s32.totalorder %s26, 1
      %p154 = por %p152, %p153
      %p156 = scmp.ne.s32.totalorder %s141, %s155
      %p157 = scmp.eq.s32.totalorder %s26, 0
      %p158 = por %p156, %p157
      %s160 = sadd.s32 %s159, 1
      %p163 = scmp.eq.s32.totalorder %s20, 1
      %p164 = scmp.ne.s32.totalorder %s159, %s161
      %p165 = scmp.eq.s32.totalorder %s20, 0
      %p166 = por %p164, %p165
      %p167 = scmp.ne.s32.totalorder %s159, %s161
      %p168 = scmp.eq.s32.totalorder %s25, 1
      %p169 = por %p167, %p168
      %p170 = scmp.ne.s32.totalorder %s161, %s162
      %p171 = scmp.eq.s32.totalorder %s25, 0
      %p172 = por %p170, %p171
      %p173 = scmp.ne.s32.totalorder %s161, %s162
      %p174 = scmp.eq.s32.totalorder %s26, 1
      %p175 = por %p173, %p174
      %p177 = scmp.ne.s32.totalorder %s162, %s176
      %p178 = scmp.eq.s32.totalorder %s26, 0
      %p179 = por %p177, %p178
      %s181 = sadd.s32 %s180, 1
      %p184 = scmp.eq.s32.totalorder %s20, 1
      %p185 = scmp.ne.s32.totalorder %s180, %s182
      %p186 = scmp.eq.s32.totalorder %s20, 0
      %p187 = por %p185, %p186
      %p188 = scmp.ne.s32.totalorder %s180, %s182
      %p189 = scmp.eq.s32.totalorder %s25, 1
      %p190 = por %p188, %p189
      %p191 = scmp.ne.s32.totalorder %s182, %s183
      %p192 = scmp.eq.s32.totalorder %s25, 0
      %p193 = por %p191, %p192
      %p194 = scmp.ne.s32.totalorder %s182, %s183
      %p195 = scmp.eq.s32.totalorder %s26, 1
      %p196 = por %p194, %p195
      %p198 = scmp.ne.s32.totalorder %s183, %s197
      %p199 = scmp.eq.s32.totalorder %s26, 0
      %p200 = por %p198, %p199
      %s202 = sadd.s32 %s201, 1
      %p205 = scmp.eq.s32.totalorder %s20, 1
      %p206 = scmp.ne.s32.totalorder %s201, %s203
      %p207 = scmp.eq.s32.totalorder %s20, 0
      %p208 = por %p206, %p207
      %p209 = scmp.ne.s32.totalorder %s201, %s203
      %p210 = scmp.eq.s32.totalorder %s25, 1
      %p211 = por %p209, %p210
      %p212 = scmp.ne.s32.totalorder %s203, %s204
      %p213 = scmp.eq.s32.totalorder %s25, 0
      %p214 = por %p212, %p213
      %p215 = scmp.ne.s32.totalorder %s203, %s204
      %p216 = scmp.eq.s32.totalorder %s26, 1
      %p217 = por %p215, %p216
      %p219 = scmp.ne.s32.totalorder %s204, %s218
      %p220 = scmp.eq.s32.totalorder %s26, 0
      %p221 = por %p219, %p220
      %s223 = sadd.s32 %s222, 1
      %p226 = scmp.eq.s32.totalorder %s20, 1
      %p227 = scmp.ne.s32.totalorder %s222, %s224
      %p228 = scmp.eq.s32.totalorder %s20, 0
      %p229 = por %p227, %p228
      %p230 = scmp.ne.s32.totalorder %s222, %s224
      %p231 = scmp.eq.s32.totalorder %s25, 1
      %p232 = por %p230, %p231
      %p233 = scmp.ne.s32.totalorder %s224, %s225
      %p234 = scmp.eq.s32.totalorder %s25, 0
      %p235 = por %p233, %p234
      %p236 = scmp.ne.s32.totalorder %s224, %s225
      %p237 = scmp.eq.s32.totalorder %s26, 1
      %p238 = por %p236, %p237
      %p240 = scmp.ne.s32.totalorder %s225, %s239
      %p241 = scmp.eq.s32.totalorder %s26, 0
      %p242 = por %p240, %p241
      %s244 = sadd.s32 %s243, 1
      %p247 = scmp.eq.s32.totalorder %s20, 1
      %p248 = scmp.ne.s32.totalorder %s243, %s245
      %p249 = scmp.eq.s32.totalorder %s20, 0
      %p250 = por %p248, %p249
      %p251 = scmp.ne.s32.totalorder %s243, %s245
      %p252 = scmp.eq.s32.totalorder %s25, 1
      %p253 = por %p251, %p252
      %p254 = scmp.ne.s32.totalorder %s245, %s246
      %p255 = scmp.eq.s32.totalorder %s25, 0
      %p256 = por %p254, %p255
      %p257 = scmp.ne.s32.totalorder %s245, %s246
      %p258 = scmp.eq.s32.totalorder %s26, 1
      %p259 = por %p257, %p258
      %p261 = scmp.ne.s32.totalorder %s246, %s260
      %p262 = scmp.eq.s32.totalorder %s26, 0
      %p263 = por %p261, %p262
      %s264 = ssub.s32 %s20, %s27
      %p265 = scmp.eq.s32.totalorder %s264, 0
      %s267 = sadd.s32 %s266, 1
      %s268 = scalar_select %p265, %s266, %s267
      %p271 = pneg %p265
      %p272 = scmp.eq.s32.totalorder %s20, 1
      %p273 = por %p271, %p272
      %p274 = scmp.ne.s32.totalorder %s266, %s269
      %p275 = scmp.eq.s32.totalorder %s20, 0
      %p276 = por %p274, %p275
      %p277 = scmp.ne.s32.totalorder %s266, %s269
      %p278 = scmp.eq.s32.totalorder %s25, 1
      %p279 = por %p277, %p278
      %p280 = scmp.ne.s32.totalorder %s269, %s270
      %p281 = scmp.eq.s32.totalorder %s25, 0
      %p282 = por %p280, %p281
      %p283 = scmp.ne.s32.totalorder %s269, %s270
      %p284 = scmp.eq.s32.totalorder %s26, 1
      %p285 = por %p283, %p284
      %p287 = scmp.ne.s32.totalorder %s270, %s286
      %p288 = scmp.eq.s32.totalorder %s26, 0
      %p289 = por %p287, %p288
      %p290 = scmp.le.s32.totalorder 1, %s20
      %p291 = scmp.lt.s32.totalorder %s20, 3
      %p292 = pnand %p290, %p291
      %p293 = pneg %p292
      // Predicated region
      $region9: #{_mamba_block_forward.1} parent=5 // pred_check
        _
      $region10: #{_mamba_block_forward.1} parent=5 // pred_check_branch
        %295 = sbr.rel (%p292) target = $region12
      $region11: #{_mamba_block_forward.1} parent=5 // pred_region
        %s296 = ssub.s32 %s20, 1
        // Predicated region
        $region13: #{_mamba_block_forward.1} parent=11 // pred_check
          %p297 = pneg %p67
        $region14: #{_mamba_block_forward.1} parent=11 // pred_check_branch
          %299 = sbr.rel (%p297) target = $region16
        $region15: #{_mamba_block_forward.1} parent=11 // pred_region
          _
        $region16: #{_mamba_block_forward.1} parent=11 // pred_fallthru
          _
        // Predicated region
        $region17: #{_mamba_block_forward.1} parent=11 // pred_check
          %p300 = pneg %p88
        $region18: #{_mamba_block_forward.1} parent=11 // pred_check_branch
          %302 = sbr.rel (%p300) target = $region20
        $region19: #{_mamba_block_forward.1} parent=11 // pred_region
          _
        $region20: #{_mamba_block_forward.1} parent=11 // pred_fallthru
          _
        // Predicated region
        $region21: #{_mamba_block_forward.1} parent=11 // pred_check
          %p303 = pneg %p109
        $region22: #{_mamba_block_forward.1} parent=11 // pred_check_branch
          %305 = sbr.rel (%p303) target = $region24
        $region23: #{_mamba_block_forward.1} parent=11 // pred_region
          _
        $region24: #{_mamba_block_forward.1} parent=11 // pred_fallthru
          _
        // Predicated region
        $region25: #{_mamba_block_forward.1} parent=11 // pred_check
          %p306 = pneg %p130
        $region26: #{_mamba_block_forward.1} parent=11 // pred_check_branch
          %308 = sbr.rel (%p306) target = $region28
        $region27: #{_mamba_block_forward.1} parent=11 // pred_region
          _
        $region28: #{_mamba_block_forward.1} parent=11 // pred_fallthru
          _
        // Predicated region
        $region29: #{_mamba_block_forward.1} parent=11 // pred_check
          %p309 = pneg %p151
        $region30: #{_mamba_block_forward.1} parent=11 // pred_check_branch
          %311 = sbr.rel (%p309) target = $region32
        $region31: #{_mamba_block_forward.1} parent=11 // pred_region
          _
        $region32: #{_mamba_block_forward.1} parent=11 // pred_fallthru
          _
        // Predicated region
        $region33: #{_mamba_block_forward.1} parent=11 // pred_check
          %p312 = pneg %p172
        $region34: #{_mamba_block_forward.1} parent=11 // pred_check_branch
          %314 = sbr.rel (%p312) target = $region36
        $region35: #{_mamba_block_forward.1} parent=11 // pred_region
          _
        $region36: #{_mamba_block_forward.1} parent=11 // pred_fallthru
          _
        // Predicated region
        $region37: #{_mamba_block_forward.1} parent=11 // pred_check
          %p315 = pneg %p193
        $region38: #{_mamba_block_forward.1} parent=11 // pred_check_branch
          %317 = sbr.rel (%p315) target = $region40
        $region39: #{_mamba_block_forward.1} parent=11 // pred_region
          _
        $region40: #{_mamba_block_forward.1} parent=11 // pred_fallthru
          _
        // Predicated region
        $region41: #{_mamba_block_forward.1} parent=11 // pred_check
          %p318 = pneg %p214
        $region42: #{_mamba_block_forward.1} parent=11 // pred_check_branch
          %320 = sbr.rel (%p318) target = $region44
        $region43: #{_mamba_block_forward.1} parent=11 // pred_region
          _
        $region44: #{_mamba_block_forward.1} parent=11 // pred_fallthru
          _
        // Predicated region
        $region45: #{_mamba_block_forward.1} parent=11 // pred_check
          %p321 = pneg %p235
        $region46: #{_mamba_block_forward.1} parent=11 // pred_check_branch
          %323 = sbr.rel (%p321) target = $region48
        $region47: #{_mamba_block_forward.1} parent=11 // pred_region
          _
        $region48: #{_mamba_block_forward.1} parent=11 // pred_fallthru
          _
        // Predicated region
        $region49: #{_mamba_block_forward.1} parent=11 // pred_check
          %p324 = pneg %p256
        $region50: #{_mamba_block_forward.1} parent=11 // pred_check_branch
          %326 = sbr.rel (%p324) target = $region52
        $region51: #{_mamba_block_forward.1} parent=11 // pred_region
          _
        $region52: #{_mamba_block_forward.1} parent=11 // pred_fallthru
          _
      $region12: #{_mamba_block_forward.1} parent=5 // pred_fallthru
        _
      %p327 = scmp.lt.s32.totalorder %s20, 2
      // Predicated region
      $region53: #{_mamba_block_forward.1} parent=5 // pred_check
        %p328 = pneg %p327
      $region54: #{_mamba_block_forward.1} parent=5 // pred_check_branch
        %330 = sbr.rel (%p328) target = $region56
      $region55: #{_mamba_block_forward.1} parent=5 // pred_region
        // Predicated region
        $region57: #{_mamba_block_forward.1} parent=55 // pred_check
          %p331 = pneg %p40
        $region58: #{_mamba_block_forward.1} parent=55 // pred_check_branch
          %333 = sbr.rel (%p331) target = $region60
        $region59: #{_mamba_block_forward.1} parent=55 // pred_region
          %p334 = scmp.lt.s32.totalorder %s20, 1
          %s335 = scalar_select %p334, %s20, 1
          %s336 = smul.addr %s335, 8
          %s337 = scalar_lea.vmem %s0, %s336
        $region60: #{_mamba_block_forward.1} parent=55 // pred_fallthru
          _
      $region56: #{_mamba_block_forward.1} parent=5 // pred_fallthru
        _
      %p338 = scmp.le.s32.totalorder 1, %s20
      %p339 = scmp.lt.s32.totalorder %s20, 3
      %p340 = pnand %p338, %p339
      %p341 = pneg %p340
      // Predicated region
      $region61: #{_mamba_block_forward.1} parent=5 // pred_check
        _
      $region62: #{_mamba_block_forward.1} parent=5 // pred_check_branch
        %343 = sbr.rel (%p340) target = $region64
      $region63: #{_mamba_block_forward.1} parent=5 // pred_region
        %s344 = ssub.s32 %s20, 1
        %p345 = scmp.lt.s32.totalorder %s25, 1
        %s346 = scalar_select %p345, %s25, 1
        %s347 = smul.addr %s346, 8
        %s348 = scalar_lea.vmem %s0, %s347
        %p349 = pneg %p46
        %p350 = pneg %p43
        %p351 = pneg %p67
        %p352 = pneg %p64
        %p353 = pneg %p88
        %p354 = pneg %p85
        %p355 = pneg %p109
        %p356 = pneg %p106
        %p357 = pneg %p130
        %p358 = pneg %p127
        %p359 = pneg %p151
        %p360 = pneg %p148
        %p361 = pneg %p172
        %p362 = pneg %p169
        %p363 = pneg %p193
        %p364 = pneg %p190
        %p365 = pneg %p214
        %p366 = pneg %p211
        %p367 = pneg %p235
        %p368 = pneg %p232
        %p369 = pneg %p256
        %p370 = pneg %p253
        %p371 = pneg %p282
        %p372 = pneg %p279
        %s373 = sand.u32 %s269, 1
        %s374 = scalar_lea.sflag [#allocation3], %s373
        %s375 = sand.u32 %s269, 1
        %s376 = smul.addr %s375, 8
        %s377 = scalar_lea.vmem [#allocation2], %s376
        %p378 = scmp.lt.s32.totalorder %s25, 1
        %s379 = scalar_select %p378, %s25, 1
        %s380 = smul.addr %s379, 8
        %s381 = scalar_lea.vmem %s0, %s380
        %v383 = vld [vmem:[%s381] sm:$0xff]
        %384 = vadd.xlane.f32.xlu0 %v383
        %v385 = vpop.xlane.xlu0 %384
        %v386 = vmul.f32 %v385, 0.03125
        %v387 = vsub.f32 %v383, %v386
        %v388 = vlaneseq
        %v389 = vand.u32 %v388, 127
        %vm390 = vcmp.lt.s32.totalorder %v389, 32
        %v391 = vsel %vm390, 1, 0
        %vm392 = vcmp.eq.s32.totalorder %v391, 1
        %v393 = vsel %vm392, %v387, 0.0
        %v394 = vmul.f32 %v393, %v393
        %395 = vadd.xlane.f32.xlu0 %v394
        %v396 = vpop.xlane.xlu0 %395
        %v397 = vmul.f32 %v396, 0.03125
        %v398 = vadd.f32 %v397, 1e-05
        %v399 = vrsqrt.pop %v398
        %v400 = vmul.f32 %v393, %v399
        %v401 = vld [vmem:[%s1] sm:$0x1]
        %v403 = vlaneseq
        %v404 = vshrl.u32 %v403, 7
        %v405 = vsub.s32 0, %v404
        %v406 = vrot.slane %v401, %v405
        %v408 = vmul.f32 %v400, %v406
        %v409 = vld [vmem:[%s2] sm:$0x1]
        %v411 = vlaneseq
        %v412 = vshrl.u32 %v411, 7
        %v413 = vsub.s32 0, %v412
        %v414 = vrot.slane %v409, %v413
        %v416 = vadd.f32 %v408, %v414
        %v418 = vrot.slane %v416, 7
        %vm420 = vcmask 1040384
        %v421 = vsel %vm420, 0.0, %v418
        %v422 = vrot.slane %v416, 1
        %vm424 = vcmask 1046528
        %v425 = vsel %vm424, %v422, 0.0
        %v426 = vpack.c.bf16 %v421, %v421
        %v427 = vpack.c.bf16 %v416, %v416
        %v428 = vpack.c.bf16 %v425, %v425
        %v429 = vld [vmem:[%s3] sm:$0xff]
        %v430 = vld [vmem:[%s3 + $0x8] sm:$0xff]
        %v431 = vld [vmem:[%s3 + $0x10] sm:$0xff]
        %v432 = vld [vmem:[%s3 + $0x18] sm:$0xff]
        %v433 = vld [vmem:[%s3 + $0x20] sm:$0xff]
        %v434 = vld [vmem:[%s3 + $0x28] sm:$0xff]
        %v435 = vld [vmem:[%s3 + $0x30] sm:$0xff]
        %v436 = vld [vmem:[%s3 + $0x38] sm:$0xff]
        %v437 = vld [vmem:[%s3 + $0x40] sm:$0xff]
        %v438 = vld [vmem:[%s3 + $0x48] sm:$0xff]
        %v439 = vld [vmem:[%s3 + $0x50] sm:$0xff]
        %v440 = vld [vmem:[%s3 + $0x58] sm:$0xff]
        %v441 = vld [vmem:[%s3 + $0x60] sm:$0xff]
        %v442 = vld [vmem:[%s3 + $0x68] sm:$0xff]
        %v443 = vld [vmem:[%s3 + $0x70] sm:$0xff]
        %v444 = vld [vmem:[%s3 + $0x78] sm:$0xff]
        %v445 = vld [vmem:[%s3 + $0x80] sm:$0xff]
        %v446 = vld [vmem:[%s3 + $0x88] sm:$0xff]
        %v447 = vld [vmem:[%s3 + $0x90] sm:$0xff]
        %v448 = vld [vmem:[%s3 + $0x98] sm:$0xff]
        %v449 = vld [vmem:[%s3 + $0xa0] sm:$0xff]
        %v450 = vld [vmem:[%s3 + $0xa8] sm:$0xff]
        %v451 = vld [vmem:[%s3 + $0xb0] sm:$0xff]
        %v452 = vld [vmem:[%s3 + $0xb8] sm:$0xff]
        %v453 = vld [vmem:[%s3 + $0xc0] sm:$0xff]
        %v454 = vld [vmem:[%s3 + $0xc8] sm:$0xff]
        %v455 = vld [vmem:[%s3 + $0xd0] sm:$0xff]
        %v456 = vld [vmem:[%s3 + $0xd8] sm:$0xff]
        %v457 = vld [vmem:[%s3 + $0xe0] sm:$0xff]
        %v458 = vld [vmem:[%s3 + $0xe8] sm:$0xff]
        %v459 = vld [vmem:[%s3 + $0xf0] sm:$0xff]
        %v460 = vld [vmem:[%s3 + $0xf8] sm:$0xff]
        %v461 = vld [vmem:[%s3 + $0x100] sm:$0xff]
        %v462 = vld [vmem:[%s3 + $0x108] sm:$0xff]
        %v463 = vld [vmem:[%s3 + $0x110] sm:$0xff]
        %v464 = vld [vmem:[%s3 + $0x118] sm:$0xff]
        %v465 = vld [vmem:[%s3 + $0x120] sm:$0xff]
        %v466 = vld [vmem:[%s3 + $0x128] sm:$0xff]
        %v467 = vld [vmem:[%s3 + $0x130] sm:$0xff]
        %v468 = vld [vmem:[%s3 + $0x138] sm:$0xff]
        %v469 = vld [vmem:[%s3 + $0x140] sm:$0xff]
        %v470 = vld [vmem:[%s3 + $0x148] sm:$0xff]
        %v471 = vld [vmem:[%s3 + $0x150] sm:$0xff]
        %v472 = vld [vmem:[%s3 + $0x158] sm:$0xff]
        %v473 = vld [vmem:[%s3 + $0x160] sm:$0xff]
        %v474 = vld [vmem:[%s3 + $0x168] sm:$0xff]
        %v475 = vld [vmem:[%s3 + $0x170] sm:$0xff]
        %v476 = vld [vmem:[%s3 + $0x178] sm:$0xff]
        %v477 = vld [vmem:[%s4] sm:$0x3]
        %v479 = vlaneseq
        %v480 = vshrl.u32 %v479, 7
        %v481 = vsub.s32 0, %v480
        %v482 = vrot.slane %v477, %v481
        %v483 = vlaneseq
        %v484 = vshrl.u32 %v483, 7
        %v485 = vsub.s32 1, %v484
        %v486 = vrot.slane %v477, %v485
        %v537 = vunpack.c.l.b16 %v429
        %v538 = vunpack.c.h.b16 %v429
        %v539 = vunpack.c.l.b16 %v430
        %v540 = vunpack.c.h.b16 %v430
        %v541 = vunpack.c.l.b16 %v431
        %v542 = vunpack.c.h.b16 %v431
        %v543 = vunpack.c.l.b16 %v432
        %v544 = vunpack.c.h.b16 %v432
        %v545 = vunpack.c.l.b16 %v433
        %v546 = vunpack.c.h.b16 %v433
        %v547 = vunpack.c.l.b16 %v434
        %v548 = vunpack.c.h.b16 %v434
        %v549 = vunpack.c.l.b16 %v435
        %v550 = vunpack.c.h.b16 %v435
        %v551 = vunpack.c.l.b16 %v436
        %v552 = vunpack.c.h.b16 %v436
        %v553 = vunpack.c.l.b16 %v437
        %v554 = vunpack.c.h.b16 %v437
        %v555 = vunpack.c.l.b16 %v438
        %v556 = vunpack.c.h.b16 %v438
        %v557 = vunpack.c.l.b16 %v439
        %v558 = vunpack.c.h.b16 %v439
        %v559 = vunpack.c.l.b16 %v440
        %v560 = vunpack.c.h.b16 %v440
        %v561 = vunpack.c.l.b16 %v441
        %v562 = vunpack.c.h.b16 %v441
        %v563 = vunpack.c.l.b16 %v442
        %v564 = vunpack.c.h.b16 %v442
        %v565 = vunpack.c.l.b16 %v443
        %v566 = vunpack.c.h.b16 %v443
        %v567 = vunpack.c.l.b16 %v444
        %v568 = vunpack.c.h.b16 %v444
        %v569 = vunpack.c.l.b16 %v445
        %v570 = vunpack.c.h.b16 %v445
        %v571 = vunpack.c.l.b16 %v446
        %v572 = vunpack.c.h.b16 %v446
        %v573 = vunpack.c.l.b16 %v447
        %v574 = vunpack.c.h.b16 %v447
        %v575 = vunpack.c.l.b16 %v448
        %v576 = vunpack.c.h.b16 %v448
        %v577 = vunpack.c.l.b16 %v449
        %v578 = vunpack.c.h.b16 %v449
        %v579 = vunpack.c.l.b16 %v450
        %v580 = vunpack.c.h.b16 %v450
        %v581 = vunpack.c.l.b16 %v451
        %v582 = vunpack.c.h.b16 %v451
        %v583 = vunpack.c.l.b16 %v452
        %v584 = vunpack.c.h.b16 %v452
        %v585 = vunpack.c.l.b16 %v453
        %v586 = vunpack.c.h.b16 %v453
        %v587 = vunpack.c.l.b16 %v454
        %v588 = vunpack.c.h.b16 %v454
        %v589 = vunpack.c.l.b16 %v455
        %v590 = vunpack.c.h.b16 %v455
        %v591 = vunpack.c.l.b16 %v456
        %v592 = vunpack.c.h.b16 %v456
        %v593 = vunpack.c.l.b16 %v457
        %v594 = vunpack.c.h.b16 %v457
        %v595 = vunpack.c.l.b16 %v458
        %v596 = vunpack.c.h.b16 %v458
        %v597 = vunpack.c.l.b16 %v459
        %v598 = vunpack.c.h.b16 %v459
        %v599 = vunpack.c.l.b16 %v460
        %v600 = vunpack.c.h.b16 %v460
        %v601 = vunpack.c.l.b16 %v461
        %v602 = vunpack.c.h.b16 %v461
        %v603 = vunpack.c.l.b16 %v462
        %v604 = vunpack.c.h.b16 %v462
        %v605 = vunpack.c.l.b16 %v463
        %v606 = vunpack.c.h.b16 %v463
        %v607 = vunpack.c.l.b16 %v464
        %v608 = vunpack.c.h.b16 %v464
        %v609 = vunpack.c.l.b16 %v465
        %v610 = vunpack.c.h.b16 %v465
        %v611 = vunpack.c.l.b16 %v466
        %v612 = vunpack.c.h.b16 %v466
        %v613 = vunpack.c.l.b16 %v467
        %v614 = vunpack.c.h.b16 %v467
        %v615 = vunpack.c.l.b16 %v468
        %v616 = vunpack.c.h.b16 %v468
        %v617 = vunpack.c.l.b16 %v469
        %v618 = vunpack.c.h.b16 %v469
        %v619 = vunpack.c.l.b16 %v470
        %v620 = vunpack.c.h.b16 %v470
        %v621 = vunpack.c.l.b16 %v471
        %v622 = vunpack.c.h.b16 %v471
        %v623 = vunpack.c.l.b16 %v472
        %v624 = vunpack.c.h.b16 %v472
        %v625 = vunpack.c.l.b16 %v473
        %v626 = vunpack.c.h.b16 %v473
        %v627 = vunpack.c.l.b16 %v474
        %v628 = vunpack.c.h.b16 %v474
        %v629 = vunpack.c.l.b16 %v475
        %v630 = vunpack.c.h.b16 %v475
        %v631 = vunpack.c.l.b16 %v476
        %v632 = vunpack.c.h.b16 %v476
        %v633 = vpack.c.b16 %v539, %v537
        %v634 = vpack.c.b16 %v540, %v538
        %v635 = vpack.c.b16 %v543, %v541
        %v636 = vpack.c.b16 %v544, %v542
        %v637 = vpack.c.b16 %v547, %v545
        %v638 = vpack.c.b16 %v548, %v546
        %v639 = vpack.c.b16 %v551, %v549
        %v640 = vpack.c.b16 %v552, %v550
        %v641 = vpack.c.b16 %v555, %v553
        %v642 = vpack.c.b16 %v556, %v554
        %v643 = vpack.c.b16 %v559, %v557
        %v644 = vpack.c.b16 %v560, %v558
        %v645 = vpack.c.b16 %v563, %v561
        %v646 = vpack.c.b16 %v564, %v562
        %v647 = vpack.c.b16 %v567, %v565
        %v648 = vpack.c.b16 %v568, %v566
        %v649 = vpack.c.b16 %v571, %v569
        %v650 = vpack.c.b16 %v572, %v570
        %v651 = vpack.c.b16 %v575, %v573
        %v652 = vpack.c.b16 %v576, %v574
        %v653 = vpack.c.b16 %v579, %v577
        %v654 = vpack.c.b16 %v580, %v578
        %v655 = vpack.c.b16 %v583, %v581
        %v656 = vpack.c.b16 %v584, %v582
        %v657 = vpack.c.b16 %v587, %v585
        %v658 = vpack.c.b16 %v588, %v586
        %v659 = vpack.c.b16 %v591, %v589
        %v660 = vpack.c.b16 %v592, %v590
        %v661 = vpack.c.b16 %v595, %v593
        %v662 = vpack.c.b16 %v596, %v594
        %v663 = vpack.c.b16 %v599, %v597
        %v664 = vpack.c.b16 %v600, %v598
        %v665 = vpack.c.b16 %v603, %v601
        %v666 = vpack.c.b16 %v604, %v602
        %v667 = vpack.c.b16 %v607, %v605
        %v668 = vpack.c.b16 %v608, %v606
        %v669 = vpack.c.b16 %v611, %v609
        %v670 = vpack.c.b16 %v612, %v610
        %v671 = vpack.c.b16 %v615, %v613
        %v672 = vpack.c.b16 %v616, %v614
        %v673 = vpack.c.b16 %v619, %v617
        %v674 = vpack.c.b16 %v620, %v618
        %v675 = vpack.c.b16 %v623, %v621
        %v676 = vpack.c.b16 %v624, %v622
        %v677 = vpack.c.b16 %v627, %v625
        %v678 = vpack.c.b16 %v628, %v626
        %v679 = vpack.c.b16 %v631, %v629
        %v680 = vpack.c.b16 %v632, %v630
        %729 = vmatprep.subr.bf16.mxu0 %v634
        %730 = vmatpush1.bf16.msra.mxu0 %v633
        %731 = vmatprep.subr.bf16.mxu0 %v636
        %732 = vmatpush1.bf16.msra.mxu0 %v635
        %733 = vmatprep.subr.bf16.mxu0 %v638
        %734 = vmatpush1.bf16.msra.mxu0 %v637
        %735 = vmatprep.subr.bf16.mxu0 %v640
        %736 = vmatpush1.bf16.msra.mxu0 %v639
        %737 = vmatprep.subr.bf16.mxu0 %v642
        %738 = vmatpush1.bf16.msra.mxu0 %v641
        %739 = vmatprep.subr.bf16.mxu0 %v644
        %740 = vmatpush1.bf16.msra.mxu0 %v643
        %741 = vmatprep.subr.bf16.mxu0 %v646
        %742 = vmatpush1.bf16.msra.mxu0 %v645
        %743 = vmatprep.subr.bf16.mxu0 %v648
        %744 = vmatpush1.bf16.msra.mxu0 %v647
        %745 = vmatprep.subr.bf16.mxu0 %v650
        %746 = vmatpush1.bf16.msra.mxu0 %v649
        %747 = vmatprep.subr.bf16.mxu0 %v652
        %748 = vmatpush1.bf16.msra.mxu0 %v651
        %749 = vmatprep.subr.bf16.mxu0 %v654
        %750 = vmatpush1.bf16.msra.mxu0 %v653
        %751 = vmatprep.subr.bf16.mxu0 %v656
        %752 = vmatpush1.bf16.msra.mxu0 %v655
        %753 = vmatprep.subr.bf16.mxu0 %v658
        %754 = vmatpush1.bf16.msra.mxu0 %v657
        %755 = vmatprep.subr.bf16.mxu0 %v660
        %756 = vmatpush1.bf16.msra.mxu0 %v659
        %757 = vmatprep.subr.bf16.mxu0 %v662
        %758 = vmatpush1.bf16.msra.mxu0 %v661
        %759 = vmatprep.subr.bf16.mxu0 %v664
        %760 = vmatpush1.bf16.msra.mxu0 %v663
        %761 = vmatprep.mubr.bf16.mxu0 %v427
        %762 = vmatmul.mubr.bf16.gmra.mrb[0].mxu0 %v426
        %v763 = vpop.f32.mrb[0].mxu0
        %v764 = vadd.f32 %v482, %v763
        %v765 = vpop.f32.mrb[0].mxu0
        %v766 = vadd.f32 %v486, %v765
        %v767 = vpop.f32.mrb[0].mxu0
        %v768 = vpop.f32.mrb[0].mxu0
        %769 = vdwg.mxu0
        %770 = vmatprep.subr.bf16.mxu0 %v666
        %771 = vmatpush1.bf16.msra.mxu0 %v665
        %772 = vmatprep.subr.bf16.mxu0 %v668
        %773 = vmatpush1.bf16.msra.mxu0 %v667
        %774 = vmatprep.subr.bf16.mxu0 %v670
        %775 = vmatpush1.bf16.msra.mxu0 %v669
        %776 = vmatprep.subr.bf16.mxu0 %v672
        %777 = vmatpush1.bf16.msra.mxu0 %v671
        %778 = vmatprep.subr.bf16.mxu0 %v674
        %779 = vmatpush1.bf16.msra.mxu0 %v673
        %780 = vmatprep.subr.bf16.mxu0 %v676
        %781 = vmatpush1.bf16.msra.mxu0 %v675
        %782 = vmatprep.subr.bf16.mxu0 %v678
        %783 = vmatpush1.bf16.msra.mxu0 %v677
        %784 = vmatprep.subr.bf16.mxu0 %v680
        %785 = vmatpush1.bf16.msra.mxu0 %v679
        %786 = vmatprep.subr.bf16.mxu0 0
        %787 = vmatpush1.bf16.msra.mxu0 0
        %788 = vmatprep.subr.bf16.mxu0 0
        %789 = vmatpush1.bf16.msra.mxu0 0
        %790 = vmatprep.subr.bf16.mxu0 0
        %791 = vmatpush1.bf16.msra.mxu0 0
        %792 = vmatprep.subr.bf16.mxu0 0
        %793 = vmatpush1.bf16.msra.mxu0 0
        %794 = vmatprep.subr.bf16.mxu0 0
        %795 = vmatpush1.bf16.msra.mxu0 0
        %796 = vmatprep.subr.bf16.mxu0 0
        %797 = vmatpush1.bf16.msra.mxu0 0
        %798 = vmatprep.subr.bf16.mxu0 0
        %799 = vmatpush1.bf16.msra.mxu0 0
        %800 = vmatprep.subr.bf16.mxu0 0
        %801 = vmatpush1.bf16.msra.mxu0 0
        %802 = vmatprep.mubr.bf16.mxu0 0
        %803 = vmatmul.mubr.bf16.gmra.mrb[0].mxu0 %v428
        %v804 = vpop.f32.mrb[0].mxu0
        %v805 = vadd.f32 %v764, %v804
        %v806 = vpop.f32.mrb[0].mxu0
        %v807 = vadd.f32 %v766, %v806
        %v808 = vpop.f32.mrb[0].mxu0
        %v809 = vpop.f32.mrb[0].mxu0
        %810 = vdwg.mxu0
        %v811 = vxor.u32 %v807, 2147483648
        %v812 = vmul.f32 %v811, 1.442695
        %v813 = vpow.pop %v812
        %v814 = vadd.f32 %v813, 1.0
        %v815 = vrcp.pop %v814
        %v816 = vmul.f32 1.0, %v815
        %v817 = vlaneseq
        %v818 = vshrl.u32 %v817, 7
        %v819 = vsub.f32 1.0, %v816
        %821 = vset.pattern.permute.xlu0 0
        %822 = vperm.xlu0 %821, %v816
        %v823 = vpop.permute.xlu0 %822
        %v825 = vmul.f32 %v823, %v805
        %vm826 = vcmp.ge.s32.totalorder %v818, 1
        %v827 = vrot.slane %v819, 7
        %v828 = vsel %vm826, %v827, 1.0
        %v829 = vrot.slane %v825, 7
        %v830 = vsel %vm826, 1, 0
        %vm831 = vcmp.eq.s32.totalorder %v830, 1
        %v832 = vsel %vm831, %v829, 0.0
        %834 = vset.pattern.permute.xlu0 0
        %835 = vperm.xlu0 %834, %v819
        %v836 = vpop.permute.xlu0 %835
        %v838 = vmul.f32 %v836, %v832
        %v839 = vadd.f32 %v838, %v825
        %v840 = vmul.f32 %v819, %v828
        %vm841 = vcmp.ge.s32.totalorder %v818, 2
        %v842 = vrot.slane %v840, 6
        %v843 = vsel %vm841, %v842, 1.0
        %v844 = vrot.slane %v839, 6
        %v845 = vsel %vm841, 1, 0
        %vm846 = vcmp.eq.s32.totalorder %v845, 1
        %v847 = vsel %vm846, %v844, 0.0
        %849 = vset.pattern.permute.xlu0 0
        %850 = vperm.xlu0 %849, %v840
        %v851 = vpop.permute.xlu0 %850
        %v853 = vmul.f32 %v851, %v847
        %v854 = vadd.f32 %v853, %v839
        %v855 = vmul.f32 %v840, %v843
        %vm856 = vcmp.ge.s32.totalorder %v818, 4
        %v857 = vrot.slane %v854, 4
        %v858 = vsel %vm856, 1, 0
        %vm859 = vcmp.eq.s32.totalorder %v858, 1
        %v860 = vsel %vm859, %v857, 0.0
        %862 = vset.pattern.permute.xlu0 0
        %863 = vperm.xlu0 %862, %v855
        %v864 = vpop.permute.xlu0 %863
        %v866 = vmul.f32 %v864, %v860
        %v867 = vadd.f32 %v866, %v854
        %v868 = vpack.c.bf16 %v867, %v867
        %v869 = vld [vmem:[%s5] sm:$0xf]
        %v870 = vld [vmem:[%s5 + $0x4] sm:$0xf]
        %v871 = vld [vmem:[%s5 + $0x8] sm:$0xf]
        %v872 = vld [vmem:[%s5 + $0xc] sm:$0xf]
        %v873 = vld [vmem:[%s5 + $0x10] sm:$0xf]
        %v874 = vld [vmem:[%s5 + $0x14] sm:$0xf]
        %v875 = vld [vmem:[%s5 + $0x18] sm:$0xf]
        %v876 = vld [vmem:[%s5 + $0x1c] sm:$0xf]
        %v877 = vld [vmem:[%s5 + $0x20] sm:$0xf]
        %v878 = vld [vmem:[%s5 + $0x24] sm:$0xf]
        %v879 = vld [vmem:[%s5 + $0x28] sm:$0xf]
        %v880 = vld [vmem:[%s5 + $0x2c] sm:$0xf]
        %v881 = vld [vmem:[%s5 + $0x30] sm:$0xf]
        %v882 = vld [vmem:[%s5 + $0x34] sm:$0xf]
        %v883 = vld [vmem:[%s5 + $0x38] sm:$0xf]
        %v884 = vld [vmem:[%s5 + $0x3c] sm:$0xf]
        %v885 = vld [vmem:[%s6] sm:$0x1]
        %v887 = vlaneseq
        %v888 = vshrl.u32 %v887, 7
        %v889 = vsub.s32 0, %v888
        %v890 = vrot.slane %v885, %v889
        %v908 = vunpack.c.l.b16 %v869
        %v909 = vunpack.c.l.b16 %v870
        %v910 = vunpack.c.l.b16 %v871
        %v911 = vunpack.c.l.b16 %v872
        %v912 = vunpack.c.l.b16 %v873
        %v913 = vunpack.c.l.b16 %v874
        %v914 = vunpack.c.l.b16 %v875
        %v915 = vunpack.c.l.b16 %v876
        %v916 = vunpack.c.l.b16 %v877
        %v917 = vunpack.c.l.b16 %v878
        %v918 = vunpack.c.l.b16 %v879
        %v919 = vunpack.c.l.b16 %v880
        %v920 = vunpack.c.l.b16 %v881
        %v921 = vunpack.c.l.b16 %v882
        %v922 = vunpack.c.l.b16 %v883
        %v923 = vunpack.c.l.b16 %v884
        %v924 = vpack.c.b16 %v909, %v908
        %v925 = vpack.c.b16 %v911, %v910
        %v926 = vpack.c.b16 %v913, %v912
        %v927 = vpack.c.b16 %v915, %v914
        %v928 = vpack.c.b16 %v917, %v916
        %v929 = vpack.c.b16 %v919, %v918
        %v930 = vpack.c.b16 %v921, %v920
        %v931 = vpack.c.b16 %v923, %v922
        %940 = vmatprep.subr.bf16.mxu0 0
        %941 = vmatpush1.bf16.msra.mxu0 %v924
        %942 = vmatprep.subr.bf16.mxu0 0
        %943 = vmatpush1.bf16.msra.mxu0 %v925
        %944 = vmatprep.subr.bf16.mxu0 0
        %945 = vmatpush1.bf16.msra.mxu0 %v926
        %946 = vmatprep.subr.bf16.mxu0 0
        %947 = vmatpush1.bf16.msra.mxu0 %v927
        %948 = vmatprep.subr.bf16.mxu0 0
        %949 = vmatpush1.bf16.msra.mxu0 %v928
        %950 = vmatprep.subr.bf16.mxu0 0
        %951 = vmatpush1.bf16.msra.mxu0 %v929
        %952 = vmatprep.subr.bf16.mxu0 0
        %953 = vmatpush1.bf16.msra.mxu0 %v930
        %954 = vmatprep.subr.bf16.mxu0 0
        %955 = vmatpush1.bf16.msra.mxu0 %v931
        %956 = vmatprep.subr.bf16.mxu0 0
        %957 = vmatpush1.bf16.msra.mxu0 0
        %958 = vmatprep.subr.bf16.mxu0 0
        %959 = vmatpush1.bf16.msra.mxu0 0
        %960 = vmatprep.subr.bf16.mxu0 0
        %961 = vmatpush1.bf16.msra.mxu0 0
        %962 = vmatprep.subr.bf16.mxu0 0
        %963 = vmatpush1.bf16.msra.mxu0 0
        %964 = vmatprep.subr.bf16.mxu0 0
        %965 = vmatpush1.bf16.msra.mxu0 0
        %966 = vmatprep.subr.bf16.mxu0 0
        %967 = vmatpush1.bf16.msra.mxu0 0
        %968 = vmatprep.subr.bf16.mxu0 0
        %969 = vmatpush1.bf16.msra.mxu0 0
        %970 = vmatprep.subr.bf16.mxu0 0
        %971 = vmatpush1.bf16.msra.mxu0 0
        %972 = vmatprep.mubr.bf16.mxu0 0
        %973 = vmatmul.mubr.bf16.gmra.mrb[0].mxu0 %v868
        %v974 = vpop.f32.mrb[0].mxu0
        %v975 = vadd.f32 %v890, %v974
        %v976 = vpop.f32.mrb[0].mxu0
        %v977 = vpop.f32.mrb[0].mxu0
        %v978 = vpop.f32.mrb[0].mxu0
        %979 = vdwg.mxu0
        %v980 = vpack.c.bf16 %v975, %v975
        %v981 = vld [vmem:[%s7] sm:$0xff]
        %v982 = vld [vmem:[%s7 + $0x8] sm:$0xff]
        %v983 = vld [vmem:[%s7 + $0x10] sm:$0xff]
        %v984 = vld [vmem:[%s7 + $0x18] sm:$0xff]
        %v985 = vld [vmem:[%s7 + $0x20] sm:$0xff]
        %v986 = vld [vmem:[%s7 + $0x28] sm:$0xff]
        %v987 = vld [vmem:[%s7 + $0x30] sm:$0xff]
        %v988 = vld [vmem:[%s7 + $0x38] sm:$0xff]
        %v989 = vld [vmem:[%s7 + $0x40] sm:$0xff]
        %v990 = vld [vmem:[%s7 + $0x48] sm:$0xff]
        %v991 = vld [vmem:[%s7 + $0x50] sm:$0xff]
        %v992 = vld [vmem:[%s7 + $0x58] sm:$0xff]
        %v993 = vld [vmem:[%s7 + $0x60] sm:$0xff]
        %v994 = vld [vmem:[%s7 + $0x68] sm:$0xff]
        %v995 = vld [vmem:[%s7 + $0x70] sm:$0xff]
        %v996 = vld [vmem:[%s7 + $0x78] sm:$0xff]
        %v997 = vld [vmem:[%s8] sm:$0x3]
        %v999 = vlaneseq
        %v1000 = vshrl.u32 %v999, 7
        %v1001 = vsub.s32 0, %v1000
        %v1002 = vrot.slane %v997, %v1001
        %v1003 = vlaneseq
        %v1004 = vshrl.u32 %v1003, 7
        %v1005 = vsub.s32 1, %v1004
        %v1006 = vrot.slane %v997, %v1005
        %v1025 = vunpack.c.l.b16 %v981
        %v1026 = vunpack.c.h.b16 %v981
        %v1027 = vunpack.c.l.b16 %v982
        %v1028 = vunpack.c.h.b16 %v982
        %v1029 = vunpack.c.l.b16 %v983
        %v1030 = vunpack.c.h.b16 %v983
        %v1031 = vunpack.c.l.b16 %v984
        %v1032 = vunpack.c.h.b16 %v984
        %v1033 = vunpack.c.l.b16 %v985
        %v1034 = vunpack.c.h.b16 %v985
        %v1035 = vunpack.c.l.b16 %v986
        %v1036 = vunpack.c.h.b16 %v986
        %v1037 = vunpack.c.l.b16 %v987
        %v1038 = vunpack.c.h.b16 %v987
        %v1039 = vunpack.c.l.b16 %v988
        %v1040 = vunpack.c.h.b16 %v988
        %v1041 = vunpack.c.l.b16 %v989
        %v1042 = vunpack.c.h.b16 %v989
        %v1043 = vunpack.c.l.b16 %v990
        %v1044 = vunpack.c.h.b16 %v990
        %v1045 = vunpack.c.l.b16 %v991
        %v1046 = vunpack.c.h.b16 %v991
        %v1047 = vunpack.c.l.b16 %v992
        %v1048 = vunpack.c.h.b16 %v992
        %v1049 = vunpack.c.l.b16 %v993
        %v1050 = vunpack.c.h.b16 %v993
        %v1051 = vunpack.c.l.b16 %v994
        %v1052 = vunpack.c.h.b16 %v994
        %v1053 = vunpack.c.l.b16 %v995
        %v1054 = vunpack.c.h.b16 %v995
        %v1055 = vunpack.c.l.b16 %v996
        %v1056 = vunpack.c.h.b16 %v996
        %v1057 = vpack.c.b16 %v1027, %v1025
        %v1058 = vpack.c.b16 %v1028, %v1026
        %v1059 = vpack.c.b16 %v1031, %v1029
        %v1060 = vpack.c.b16 %v1032, %v1030
        %v1061 = vpack.c.b16 %v1035, %v1033
        %v1062 = vpack.c.b16 %v1036, %v1034
        %v1063 = vpack.c.b16 %v1039, %v1037
        %v1064 = vpack.c.b16 %v1040, %v1038
        %v1065 = vpack.c.b16 %v1043, %v1041
        %v1066 = vpack.c.b16 %v1044, %v1042
        %v1067 = vpack.c.b16 %v1047, %v1045
        %v1068 = vpack.c.b16 %v1048, %v1046
        %v1069 = vpack.c.b16 %v1051, %v1049
        %v1070 = vpack.c.b16 %v1052, %v1050
        %v1071 = vpack.c.b16 %v1055, %v1053
        %v1072 = vpack.c.b16 %v1056, %v1054
        %1089 = vmatprep.subr.bf16.mxu0 %v1058
        %1090 = vmatpush1.bf16.msra.mxu0 %v1057
        %1091 = vmatprep.subr.bf16.mxu0 %v1060
        %1092 = vmatpush1.bf16.msra.mxu0 %v1059
        %1093 = vmatprep.subr.bf16.mxu0 %v1062
        %1094 = vmatpush1.bf16.msra.mxu0 %v1061
        %1095 = vmatprep.subr.bf16.mxu0 %v1064
        %1096 = vmatpush1.bf16.msra.mxu0 %v1063
        %1097 = vmatprep.subr.bf16.mxu0 %v1066
        %1098 = vmatpush1.bf16.msra.mxu0 %v1065
        %1099 = vmatprep.subr.bf16.mxu0 %v1068
        %1100 = vmatpush1.bf16.msra.mxu0 %v1067
        %1101 = vmatprep.subr.bf16.mxu0 %v1070
        %1102 = vmatpush1.bf16.msra.mxu0 %v1069
        %1103 = vmatprep.subr.bf16.mxu0 %v1072
        %1104 = vmatpush1.bf16.msra.mxu0 %v1071
        %1105 = vmatprep.subr.bf16.mxu0 0
        %1106 = vmatpush1.bf16.msra.mxu0 0
        %1107 = vmatprep.subr.bf16.mxu0 0
        %1108 = vmatpush1.bf16.msra.mxu0 0
        %1109 = vmatprep.subr.bf16.mxu0 0
        %1110 = vmatpush1.bf16.msra.mxu0 0
        %1111 = vmatprep.subr.bf16.mxu0 0
        %1112 = vmatpush1.bf16.msra.mxu0 0
        %1113 = vmatprep.subr.bf16.mxu0 0
        %1114 = vmatpush1.bf16.msra.mxu0 0
        %1115 = vmatprep.subr.bf16.mxu0 0
        %1116 = vmatpush1.bf16.msra.mxu0 0
        %1117 = vmatprep.subr.bf16.mxu0 0
        %1118 = vmatpush1.bf16.msra.mxu0 0
        %1119 = vmatprep.subr.bf16.mxu0 0
        %1120 = vmatpush1.bf16.msra.mxu0 0
        %1121 = vmatprep.mubr.bf16.mxu0 0
        %1122 = vmatmul.mubr.bf16.gmra.mrb[0].mxu0 %v980
        %v1123 = vpop.f32.mrb[0].mxu0
        %v1124 = vadd.f32 %v1002, %v1123
        %v1125 = vpop.f32.mrb[0].mxu0
        %v1126 = vadd.f32 %v1006, %v1125
        %v1127 = vpop.f32.mrb[0].mxu0
        %v1128 = vpop.f32.mrb[0].mxu0
        %1129 = vdwg.mxu0
        %v1130 = vxor.u32 %v1124, 2147483648
        %v1131 = vmul.f32 %v1130, 1.442695
        %v1132 = vpow.pop %v1131
        %v1133 = vadd.f32 %v1132, 1.0
        %v1134 = vrcp.pop %v1133
        %v1135 = vmul.f32 1.0, %v1134
        %v1136 = vmul.f32 %v1135, %v1126
        %v1137 = vpack.c.bf16 %v1136, %v1136
        %v1138 = vld [vmem:[%s9] sm:$0xf]
        %v1139 = vld [vmem:[%s9 + $0x4] sm:$0xf]
        %v1140 = vld [vmem:[%s9 + $0x8] sm:$0xf]
        %v1141 = vld [vmem:[%s9 + $0xc] sm:$0xf]
        %v1142 = vld [vmem:[%s9 + $0x10] sm:$0xf]
        %v1143 = vld [vmem:[%s9 + $0x14] sm:$0xf]
        %v1144 = vld [vmem:[%s9 + $0x18] sm:$0xf]
        %v1145 = vld [vmem:[%s9 + $0x1c] sm:$0xf]
        %v1146 = vld [vmem:[%s9 + $0x20] sm:$0xf]
        %v1147 = vld [vmem:[%s9 + $0x24] sm:$0xf]
        %v1148 = vld [vmem:[%s9 + $0x28] sm:$0xf]
        %v1149 = vld [vmem:[%s9 + $0x2c] sm:$0xf]
        %v1150 = vld [vmem:[%s9 + $0x30] sm:$0xf]
        %v1151 = vld [vmem:[%s9 + $0x34] sm:$0xf]
        %v1152 = vld [vmem:[%s9 + $0x38] sm:$0xf]
        %v1153 = vld [vmem:[%s9 + $0x3c] sm:$0xf]
        %v1154 = vld [vmem:[%s10] sm:$0x1]
        %v1156 = vlaneseq
        %v1157 = vshrl.u32 %v1156, 7
        %v1158 = vsub.s32 0, %v1157
        %v1159 = vrot.slane %v1154, %v1158
        %v1177 = vunpack.c.l.b16 %v1138
        %v1178 = vunpack.c.l.b16 %v1139
        %v1179 = vunpack.c.l.b16 %v1140
        %v1180 = vunpack.c.l.b16 %v1141
        %v1181 = vunpack.c.l.b16 %v1142
        %v1182 = vunpack.c.l.b16 %v1143
        %v1183 = vunpack.c.l.b16 %v1144
        %v1184 = vunpack.c.l.b16 %v1145
        %v1185 = vunpack.c.l.b16 %v1146
        %v1186 = vunpack.c.l.b16 %v1147
        %v1187 = vunpack.c.l.b16 %v1148
        %v1188 = vunpack.c.l.b16 %v1149
        %v1189 = vunpack.c.l.b16 %v1150
        %v1190 = vunpack.c.l.b16 %v1151
        %v1191 = vunpack.c.l.b16 %v1152
        %v1192 = vunpack.c.l.b16 %v1153
        %v1193 = vpack.c.b16 %v1178, %v1177
        %v1194 = vpack.c.b16 %v1180, %v1179
        %v1195 = vpack.c.b16 %v1182, %v1181
        %v1196 = vpack.c.b16 %v1184, %v1183
        %v1197 = vpack.c.b16 %v1186, %v1185
        %v1198 = vpack.c.b16 %v1188, %v1187
        %v1199 = vpack.c.b16 %v1190, %v1189
        %v1200 = vpack.c.b16 %v1192, %v1191
        %1209 = vmatprep.subr.bf16.mxu0 0
        %1210 = vmatpush1.bf16.msra.mxu0 %v1193
        %1211 = vmatprep.subr.bf16.mxu0 0
        %1212 = vmatpush1.bf16.msra.mxu0 %v1194
        %1213 = vmatprep.subr.bf16.mxu0 0
        %1214 = vmatpush1.bf16.msra.mxu0 %v1195
        %1215 = vmatprep.subr.bf16.mxu0 0
        %1216 = vmatpush1.bf16.msra.mxu0 %v1196
        %1217 = vmatprep.subr.bf16.mxu0 0
        %1218 = vmatpush1.bf16.msra.mxu0 %v1197
        %1219 = vmatprep.subr.bf16.mxu0 0
        %1220 = vmatpush1.bf16.msra.mxu0 %v1198
        %1221 = vmatprep.subr.bf16.mxu0 0
        %1222 = vmatpush1.bf16.msra.mxu0 %v1199
        %1223 = vmatprep.subr.bf16.mxu0 0
        %1224 = vmatpush1.bf16.msra.mxu0 %v1200
        %1225 = vmatprep.subr.bf16.mxu0 0
        %1226 = vmatpush1.bf16.msra.mxu0 0
        %1227 = vmatprep.subr.bf16.mxu0 0
        %1228 = vmatpush1.bf16.msra.mxu0 0
        %1229 = vmatprep.subr.bf16.mxu0 0
        %1230 = vmatpush1.bf16.msra.mxu0 0
        %1231 = vmatprep.subr.bf16.mxu0 0
        %1232 = vmatpush1.bf16.msra.mxu0 0
        %1233 = vmatprep.subr.bf16.mxu0 0
        %1234 = vmatpush1.bf16.msra.mxu0 0
        %1235 = vmatprep.subr.bf16.mxu0 0
        %1236 = vmatpush1.bf16.msra.mxu0 0
        %1237 = vmatprep.subr.bf16.mxu0 0
        %1238 = vmatpush1.bf16.msra.mxu0 0
        %1239 = vmatprep.subr.bf16.mxu0 0
        %1240 = vmatpush1.bf16.msra.mxu0 0
        %1241 = vmatprep.mubr.bf16.mxu0 0
        %1242 = vmatmul.mubr.bf16.gmra.mrb[0].mxu0 %v1137
        %v1243 = vpop.f32.mrb[0].mxu0
        %v1244 = vadd.f32 %v1159, %v1243
        %v1245 = vpop.f32.mrb[0].mxu0
        %v1246 = vpop.f32.mrb[0].mxu0
        %v1247 = vpop.f32.mrb[0].mxu0
        %1248 = vdwg.mxu0
        %v1249 = vadd.f32 %v383, %v1244
        %1250 = vst [vmem:[%s377] sm:$0xff] %v1249
        %s1251 = sand.u32 %s269, 1
        %s1252 = scalar_lea.sflag [#allocation3], %s1251
        %s1253 = sand.u32 %s269, 1
        %s1254 = smul.addr %s1253, 8
        %s1255 = scalar_lea.vmem [#allocation2], %s1254
        // Predicated region
        $region65: #{_mamba_block_forward.1} parent=63 // pred_check
          %p1256 = pneg %p279
        $region66: #{_mamba_block_forward.1} parent=63 // pred_check_branch
          %1258 = sbr.rel (%p1256) target = $region68
        $region67: #{_mamba_block_forward.1} parent=63 // pred_region
          %s1260 = ssub.s32 128, 128
          %1261 = vsyncadd %s1252, %s1260
          %s1262 = smul.addr %s25, 128
          %s1263 = scalar_lea.hbm %s11, %s1262
          %s1265 = sshll.u32 %s1255, 4
          %s1266 = int_to_ptr.vmem [resolvable:$true] %s1265
          %1268 = dma.vmem_to_hbm [thread:$0]  %s1266, 128, %s1263, %s1252
        $region68: #{_mamba_block_forward.1} parent=63 // pred_fallthru
          _
      $region64: #{_mamba_block_forward.1} parent=5 // pred_fallthru
        _
      %p1269 = scmp.le.s32.totalorder 2, %s20
      // Predicated region
      $region69: #{_mamba_block_forward.1} parent=5 // pred_check
        %p1270 = pneg %p1269
      $region70: #{_mamba_block_forward.1} parent=5 // pred_check_branch
        %1272 = sbr.rel (%p1270) target = $region72
      $region71: #{_mamba_block_forward.1} parent=5 // pred_region
        %s1273 = ssub.s32 %s20, 2
        // Predicated region
        $region73: #{_mamba_block_forward.1} parent=71 // pred_check
          %p1274 = pneg %p285
        $region74: #{_mamba_block_forward.1} parent=71 // pred_check_branch
          %1276 = sbr.rel (%p1274) target = $region76
        $region75: #{_mamba_block_forward.1} parent=71 // pred_region
          %s1277 = sand.u32 %s270, 1
          %s1278 = scalar_lea.sflag [#allocation3], %s1277
          %s1279 = sand.u32 %s270, 1
          %s1280 = smul.addr %s1279, 8
          %s1281 = scalar_lea.vmem [#allocation2], %s1280
          %1282 = dma.done %s1278, 128
        $region76: #{_mamba_block_forward.1} parent=71 // pred_fallthru
          _
      $region72: #{_mamba_block_forward.1} parent=5 // pred_fallthru
        _
    $region6: #{_mamba_block_forward.1} parent=1 // loop_footer
      %s24 = sadd.s32 1, %s20
    $region7: #{_mamba_block_forward.1} parent=1 // loop_footer_branch
      %19 = sbr.rel target = $region3
    $region8: #{_mamba_block_forward.1} parent=1 // loop_exit
      _
    %1283 = vsyncpa [#allocation3], 1
    %s1284 = scalar_lea.sflag [#allocation3], 1
    %1285 = vsyncpa %s1284, 1

</llo_original>
